<compile_context>
chip_gen: v7x
topology: tpu7x:2x2x1
jax: 0.10.0
libtpu: 0.0.40
codegen_flags: <defaults>
</compile_context>

<pallas_src>
import numpy as np
import jax
import jax.numpy as jnp
from jax import lax
from jax.experimental import pallas as pl
from jax.experimental.pallas import tpu as pltpu


# ----------------------------------------------------------------------------
# Fused forward kernel.
# ----------------------------------------------------------------------------
def bilstm_forward(x_sbc, cnn_slab, wide_slab, *, M, H):
    """x_sbc: (S, B, C) module input (seq-first). Returns (S, B, 1)."""
    S, B, C = x_sbc.shape
    H2, H8 = 2 * H, 8 * H
    N = S * B
    x2 = x_sbc.reshape(N, C)          # contiguous row-major flatten; free in XLA

    # Row offsets inside the packed parameter slabs.
    R_W1, R_W2, R_W3 = 0, 3 * C, 3 * C + 3 * M
    R_B1 = 3 * C + 6 * M
    R_B2, R_B3 = R_B1 + 1, R_B1 + 2
    R_WIHF, R_WIHR = H2, H2 + C
    R_BG, R_FC = H2 + 2 * C, H2 + 2 * C + 1

    def kernel(x_ref, cnn_ref, wide_ref, o_ref, xsum_ref, h_ref):
        xv = x_ref[...]                                        # (N, C)

        # Batch-position masks: the conv runs over the b axis inside each s group.
        row = lax.broadcasted_iota(jnp.int32, (N, 1), 0)
        b_idx = row % B
        is_first = b_idx == 0
        is_last = b_idx == (B - 1)

        def conv_k3(a2, w_v, b_v):
            # Conv1d(kernel=3, stride=1, pad=1) over the b axis as one im2col matmul.
            # Neighbour rows come from XLU rolls; wrapped rows are zeroed by the masks.
            up = pltpu.roll(a2, shift=1, axis=0)               # row r-1
            dn = pltpu.roll(a2, shift=N - 1, axis=0)           # row r+1
            left = jnp.where(is_first, 0.0, up)                # zero-pad at b=0
            right = jnp.where(is_last, 0.0, dn)                # zero-pad at b=B-1
            col = jnp.concatenate([left, a2, right], axis=-1)  # (N, 3*cin)
            return jnp.dot(col, w_v, preferred_element_type=jnp.float32) + b_v

        def elu(y):
            # TODO(synk): exp(min(y,0))-1 keeps parity with the reference formulation;
            # expm1 would be slightly more accurate for tiny |y|.
            return jnp.where(y > 0, y, jnp.exp(jnp.minimum(y, 0.0)) - 1.0)

        # CNNBlock (BatchNorm in eval mode is folded into the packed conv weights/biases;
        # conv2 intentionally reuses the conv1 BatchNorm, matching the PyTorch module).
        # TODO(synk): nn.Dropout(p=0.5) is identity under inference semantics.
        a = elu(conv_k3(xv, cnn_ref[R_W1:R_W1 + 3 * C, :M], cnn_ref[R_B1:R_B1 + 1, :M]))
        a = elu(conv_k3(a, cnn_ref[R_W2:R_W2 + 3 * M, :M], cnn_ref[R_B2:R_B2 + 1, :M]))
        a = conv_k3(a, cnn_ref[R_W3:R_W3 + 3 * M, :C], cnn_ref[R_B3:R_B3 + 1, :C])
        y2 = (a + xv) * xv                                     # residual, then x * input

        # Hoisted LSTM input projections for BOTH directions / all timesteps,
        # pre-combined per step (fwd @ t + rev @ S-1-t + gate biases) so the serial
        # recurrence reads ONE tile-aligned (B, 8H) slab per step.
        xpf = (jnp.dot(y2, wide_ref[R_WIHF:R_WIHF + C, :],
                       preferred_element_type=jnp.float32)
               + wide_ref[R_BG:R_BG + 1, :])                   # (N, 8H) fwd + biases
        xpr = jnp.dot(y2, wide_ref[R_WIHR:R_WIHR + C, :],
                      preferred_element_type=jnp.float32)      # (N, 8H) rev
        for t in range(S):                                     # one-time, off the chain
            xsum_ref[t] = (xpf[t * B:(t + 1) * B, :]
                           + xpr[(S - 1 - t) * B:(S - t) * B, :])

        whh_v = wide_ref[0:H2, :]                              # hoisted (2H, 8H) weights

        def step(t, carry):
            h_cat, c_cat = carry                               # (B, 2H): [fwd | rev]
            gates = (jnp.dot(h_cat, whh_v, preferred_element_type=jnp.float32)
                     + xsum_ref[t])                            # (B, 8H) = 128 lanes
            sg = jax.nn.sigmoid(gates)                         # whole-vreg sigmoid
            th_g = jnp.tanh(gates[:, 2 * H2:3 * H2])           # tanh on g columns only
            c_new = sg[:, H2:2 * H2] * c_cat + sg[:, 0:H2] * th_g
            h_new = sg[:, 3 * H2:4 * H2] * jnp.tanh(c_new)
            h_ref[t] = h_new                                   # single merged store
            return h_new, c_new

        z = jnp.zeros((B, H2), jnp.float32)
        lax.fori_loop(0, S, step, (z, z), unroll=True)         # S steps (dirs fused)

        # Deferred fc on the VPU/XLU: broadcast multiply + lane reduction; the reverse
        # direction (step t holds seq position S-1-t) is re-indexed once here.
        hall = h_ref[...]                                      # (S, B, 2H)
        wfc_v = wide_ref[R_FC:R_FC + 1, 0:H2]                  # (1, 2H) [fwd | rev]
        bfc_v = wide_ref[R_FC:R_FC + 1, H2:H2 + 1]             # (1, 1)
        prod = hall * wfc_v
        pf = jnp.sum(prod[:, :, :H], axis=-1, keepdims=True)   # (S, B, 1), seq order
        pr = jnp.sum(prod[:, :, H:], axis=-1, keepdims=True)   # (S, B, 1), step order
        for s in range(S):                                     # one-time tiny stores
            o_ref[s] = pf[s] + pr[S - 1 - s] + bfc_v

    return pl.pallas_call(
        kernel,
        out_shape=jax.ShapeDtypeStruct((S, B, 1), jnp.float32),
        in_specs=[pl.BlockSpec(memory_space=pltpu.MemorySpace.VMEM)] * 3,
        out_specs=pl.BlockSpec(memory_space=pltpu.MemorySpace.VMEM),
        scratch_shapes=[pltpu.VMEM((S, B, H8), jnp.float32),   # pre-summed gate inputs
                        pltpu.VMEM((S, B, H2), jnp.float32)],  # per-step hiddens
        compiler_params=pltpu.CompilerParams(vmem_limit_bytes=32 * 1024 * 1024),
    )(x2, cnn_slab, wide_slab)


# ----------------------------------------------------------------------------
# Deterministic parameter init (PyTorch shapes) + kernel-friendly packing.
# ----------------------------------------------------------------------------
def _pack_gate_cols(w_t, d, H):
    """Place gate g (PyTorch order i,f,g,o) of direction d (0=fwd, 1=rev) from a
    (rows, 4H) matrix into columns [(2g+d)H : (2g+d+1)H] of a (rows, 8H) matrix."""
    rows = w_t.shape[0]
    out = jnp.zeros((rows, 8 * H), jnp.float32)
    for g in range(4):
        out = out.at[:, (2 * g + d) * H:(2 * g + d + 1) * H].set(
            w_t[:, g * H:(g + 1) * H])
    return out


def init_params(key, C, M, H):
    ks = jax.random.split(key, 20)

    def u(k, shape, scale):
        return jax.random.uniform(k, shape, jnp.float32, -scale, scale)

    raw = {}
    raw["w1"] = u(ks[0], (M, C, 3), 1.0 / np.sqrt(C * 3.0))
    raw["b1"] = u(ks[1], (M,),      1.0 / np.sqrt(C * 3.0))
    raw["w2"] = u(ks[2], (M, M, 3), 1.0 / np.sqrt(M * 3.0))
    raw["b2"] = u(ks[3], (M,),      1.0 / np.sqrt(M * 3.0))
    raw["w3"] = u(ks[4], (C, M, 3), 1.0 / np.sqrt(M * 3.0))
    raw["b3"] = u(ks[5], (C,),      1.0 / np.sqrt(M * 3.0))
    raw["g1"]  = 1.0 + 0.1 * u(ks[6], (M,), 1.0)
    raw["be1"] = 0.1 * u(ks[7], (M,), 1.0)
    raw["g2"]  = 1.0 + 0.1 * u(ks[8], (C,), 1.0)
    raw["be2"] = 0.1 * u(ks[9], (C,), 1.0)
    sc = 1.0 / np.sqrt(H)
    raw["wih_f"] = u(ks[10], (4 * H, C), sc)
    raw["whh_f"] = u(ks[11], (4 * H, H), sc)
    raw["bih_f"] = u(ks[12], (4 * H,), sc)
    raw["bhh_f"] = u(ks[13], (4 * H,), sc)
    raw["wih_r"] = u(ks[14], (4 * H, C), sc)
    raw["whh_r"] = u(ks[15], (4 * H, H), sc)
    raw["bih_r"] = u(ks[16], (4 * H,), sc)
    raw["bhh_r"] = u(ks[17], (4 * H,), sc)
    fsc = 1.0 / np.sqrt(2.0 * H)
    raw["wfc"] = u(ks[18], (1, 2 * H), fsc)
    raw["bfc"] = u(ks[19], (1,), fsc)
    return raw


def pack_params(raw, C, M, H):
    """Pack everything into two slabs: `cnn` (conv weights/biases, eval-BN folded in)
    and `wide` (128-lane LSTM weights: whh, wih fwd/rev, gate biases, fc row + bias)."""
    bn_scale = 1.0 / np.sqrt(1.0 + 1e-5)      # eval BN: running_mean=0, running_var=1
    s1 = raw["g1"] * bn_scale
    s2 = raw["g2"] * bn_scale

    def conv_pack(w, s):
        # torch (Cout, Cin, 3) -> (3*Cin, Cout), tap-major im2col order, BN scale folded.
        wp = jnp.transpose(w, (2, 1, 0)).reshape(w.shape[2] * w.shape[1], w.shape[0])
        return wp * s[None, :]

    w1p, b1p = conv_pack(raw["w1"], s1), raw["b1"] * s1 + raw["be1"]
    w2p, b2p = conv_pack(raw["w2"], s1), raw["b2"] * s1 + raw["be1"]
    w3p, b3p = conv_pack(raw["w3"], s2), raw["b3"] * s2 + raw["be2"]

    LW = max(M, C)
    cnn = jnp.zeros((3 * C + 6 * M + 3, LW), jnp.float32)
    cnn = cnn.at[0:3 * C, :M].set(w1p)
    cnn = cnn.at[3 * C:3 * C + 3 * M, :M].set(w2p)
    cnn = cnn.at[3 * C + 3 * M:3 * C + 6 * M, :C].set(w3p)
    r0 = 3 * C + 6 * M
    cnn = cnn.at[r0, :M].set(b1p)
    cnn = cnn.at[r0 + 1, :M].set(b2p)
    cnn = cnn.at[r0 + 2, :C].set(b3p)

    H2, H8 = 2 * H, 8 * H
    whh = jnp.concatenate([_pack_gate_cols(raw["whh_f"].T, 0, H),
                           _pack_gate_cols(raw["whh_r"].T, 1, H)], axis=0)   # (2H, 8H)
    wihf = _pack_gate_cols(raw["wih_f"].T, 0, H)                             # (C, 8H)
    wihr = _pack_gate_cols(raw["wih_r"].T, 1, H)                             # (C, 8H)
    bg = (_pack_gate_cols((raw["bih_f"] + raw["bhh_f"]).reshape(1, 4 * H), 0, H)
          + _pack_gate_cols((raw["bih_r"] + raw["bhh_r"]).reshape(1, 4 * H), 1, H))

    wide = jnp.zeros((H2 + 2 * C + 2, H8), jnp.float32)
    wide = wide.at[0:H2, :].set(whh)
    wide = wide.at[H2:H2 + C, :].set(wihf)
    wide = wide.at[H2 + C:H2 + 2 * C, :].set(wihr)
    wide = wide.at[H2 + 2 * C, :].set(bg[0])
    wide = wide.at[H2 + 2 * C + 1, :H2].set(raw["wfc"][0])
    wide = wide.at[H2 + 2 * C + 1, H2].set(raw["bfc"][0])
    return cnn, wide


# ----------------------------------------------------------------------------
# Pure-JAX reference (mirrors the PyTorch forward, eval mode) for validation.
# ----------------------------------------------------------------------------
def reference_forward(x, raw):
    def conv1d(a, w, b):                       # a: (N, Cin, L), torch Conv1d pad=1
        ap = jnp.pad(a, ((0, 0), (0, 0), (1, 1)))
        out = jnp.zeros((a.shape[0], w.shape[0], a.shape[2]), jnp.float32)
        out = out + b[None, :, None]
        for k in range(3):
            out = out + jnp.einsum("ncl,oc->nol",
                                   ap[:, :, k:k + a.shape[2]], w[:, :, k])
        return out

    def bn(a, g, be):
        s = g / jnp.sqrt(1.0 + 1e-5)
        return a * s[None, :, None] + be[None, :, None]

    def elu(a):
        return jnp.where(a > 0, a, jnp.exp(jnp.minimum(a, 0.0)) - 1.0)

    residual = x
    a = jnp.transpose(x, (0, 2, 1))            # (S, C, B) -> conv length = B
    a = elu(bn(conv1d(a, raw["w1"], raw["b1"]), raw["g1"], raw["be1"]))
    a = elu(bn(conv1d(a, raw["w2"], raw["b2"]), raw["g1"], raw["be1"]))
    a = bn(conv1d(a, raw["w3"], raw["b3"]), raw["g2"], raw["be2"])
    a = jnp.transpose(a, (0, 2, 1)) + residual
    a = a * x

    S, B, _ = x.shape
    H = raw["whh_f"].shape[1]

    def run_dir(seq, wih, whh, bih, bhh):
        h = jnp.zeros((B, H), jnp.float32)
        c = jnp.zeros((B, H), jnp.float32)
        outs = []
        for t in range(seq.shape[0]):
            gates = seq[t] @ wih.T + h @ whh.T + bih + bhh
            i = jax.nn.sigmoid(gates[:, :H])
            f = jax.nn.sigmoid(gates[:, H:2 * H])
            g = jnp.tanh(gates[:, 2 * H:3 * H])
            o = jax.nn.sigmoid(gates[:, 3 * H:])
            c = f * c + i * g
            h = o * jnp.tanh(c)
            outs.append(h)
        return jnp.stack(outs, 0)

    hfwd = run_dir(a, raw["wih_f"], raw["whh_f"], raw["bih_f"], raw["bhh_f"])
    hbwd = run_dir(a[::-1], raw["wih_r"], raw["whh_r"],
                   raw["bih_r"], raw["bhh_r"])[::-1]
    cat = jnp.concatenate([hfwd, hbwd], axis=-1)       # (S, B, 2H)
    return cat @ raw["wfc"].T + raw["bfc"]


if __name__ == "__main__":
    S, B, C, M, H = 8, 2, 4, 8, 16        # seq, batch, input_size, M_hidden, L_hidden
    key = jax.random.PRNGKey(0)
    kx, kp = jax.random.split(key)
    x = jax.random.normal(kx, (S, B, C), jnp.float32)  # module input (S, B, C)

    raw = init_params(kp, C, M, H)
    cnn_slab, wide_slab = pack_params(raw, C, M, H)

    out = bilstm_forward(x, cnn_slab, wide_slab, M=M, H=H)
    out = jax.block_until_ready(out)
    assert out.shape == (S, B, 1)

    ref = reference_forward(x, raw)
    np.testing.assert_allclose(np.asarray(out), np.asarray(ref),
                               atol=1e-2, rtol=1e-2)
    print("KERNEL_OK")
</pallas_src>

<mosaic_0001>
module attributes {stable_mosaic.version = 11 : i64} {
  func.func @kernel(%arg0: memref<16x4xf32, #tpu.memory_space<vmem>>, %arg1: memref<63x8xf32, #tpu.memory_space<vmem>>, %arg2: memref<42x128xf32, #tpu.memory_space<vmem>>, %arg3: memref<8x2x1xf32, #tpu.memory_space<vmem>>, %arg4: memref<8x2x128xf32, #tpu.memory_space<vmem>>, %arg5: memref<8x2x32xf32, #tpu.memory_space<vmem>>) attributes {dimension_semantics = [], scalar_prefetch = 0 : i64, scratch_operands = 2 : i64, tpu.core_type = #tpu.core_type<tc>} {
    %c0 = arith.constant 0 : index
    %c0_0 = arith.constant 0 : index
    %0 = vector.load %arg0[%c0, %c0_0] : memref<16x4xf32, #tpu.memory_space<vmem>>, vector<16x4xf32>
    %1 = tpu.iota {dimensions = array<i32: 0>} : vector<16x1xi32>
    %c2_i32 = arith.constant 2 : i32
    %c0_i32 = arith.constant 0 : i32
    %2 = arith.cmpi eq, %c2_i32, %c0_i32 : i32
    %c1_i32 = arith.constant 1 : i32
    %3 = arith.select %2, %c1_i32, %c2_i32 : i32
    %4 = vector.broadcast %3 : i32 to vector<16x1xi32>
    %5 = arith.remsi %1, %4 : vector<16x1xi32>
    %c0_i32_1 = arith.constant 0 : i32
    %6 = vector.broadcast %c0_i32_1 : i32 to vector<16x1xi32>
    %7 = arith.cmpi ne, %5, %6 : vector<16x1xi32>
    %c0_i32_2 = arith.constant 0 : i32
    %8 = vector.broadcast %c0_i32_2 : i32 to vector<16x1xi32>
    %9 = arith.cmpi slt, %5, %8 : vector<16x1xi32>
    %c0_i32_3 = arith.constant 0 : i32
    %10 = arith.cmpi slt, %3, %c0_i32_3 : i32
    %11 = vector.broadcast %10 : i1 to vector<16x1xi1>
    %12 = vector.broadcast %11 : vector<16x1xi1> to vector<16x1xi1>
    %13 = arith.xori %9, %12 : vector<16x1xi1>
    %14 = arith.andi %13, %7 : vector<16x1xi1>
    %15 = vector.broadcast %3 : i32 to vector<16x1xi32>
    %16 = arith.addi %5, %15 : vector<16x1xi32>
    %17 = arith.select %14, %16, %5 : vector<16x1xi1>, vector<16x1xi32>
    %c0_i32_4 = arith.constant 0 : i32
    %18 = vector.broadcast %c0_i32_4 : i32 to vector<16x1xi32>
    %19 = arith.cmpi eq, %17, %18 : vector<16x1xi32>
    %c1_i32_5 = arith.constant 1 : i32
    %20 = vector.broadcast %c1_i32_5 : i32 to vector<16x1xi32>
    %21 = arith.cmpi eq, %17, %20 : vector<16x1xi32>
    %c0_6 = arith.constant 0 : index
    %c0_7 = arith.constant 0 : index
    %22 = vector.load %arg1[%c0_6, %c0_7] : memref<63x8xf32, #tpu.memory_space<vmem>>, vector<12x8xf32>
    %c60 = arith.constant 60 : index
    %c0_8 = arith.constant 0 : index
    %23 = vector.load %arg1[%c60, %c0_8] : memref<63x8xf32, #tpu.memory_space<vmem>>, vector<1x8xf32>
    %c1_i32_9 = arith.constant 1 : i32
    %24 = tpu.dynamic_rotate %0 by %c1_i32_9 dim 0 : vector<16x4xf32>, i32 -> vector<16x4xf32>
    %c15_i32 = arith.constant 15 : i32
    %25 = tpu.dynamic_rotate %0 by %c15_i32 dim 0 : vector<16x4xf32>, i32 -> vector<16x4xf32>
    %cst = arith.constant 0.000000e+00 : f32
    %26 = vector.shape_cast %19 : vector<16x1xi1> to vector<16x1xi1>
    %27 = vector.broadcast %26 : vector<16x1xi1> to vector<16x4xi1>
    %28 = vector.broadcast %cst : f32 to vector<16x4xf32>
    %29 = arith.select %27, %28, %24 : vector<16x4xi1>, vector<16x4xf32>
    %cst_10 = arith.constant 0.000000e+00 : f32
    %30 = vector.shape_cast %21 : vector<16x1xi1> to vector<16x1xi1>
    %31 = vector.broadcast %30 : vector<16x1xi1> to vector<16x4xi1>
    %32 = vector.broadcast %cst_10 : f32 to vector<16x4xf32>
    %33 = arith.select %31, %32, %25 : vector<16x4xi1>, vector<16x4xf32>
    %34 = tpu.concatenate %29, %0, %33 in 1 : vector<16x4xf32>, vector<16x4xf32>, vector<16x4xf32> -> vector<16x12xf32>
    %cst_11 = arith.constant dense<0.000000e+00> : vector<16x8xf32>
    %35 = tpu.matmul %34, %22, %cst_11 {dimension_numbers = #tpu.dot_dimension_numbers<[1], [0], [0], [1], [0, 0, 1, 1], [], []>} : vector<16x12xf32>, vector<12x8xf32>, vector<16x8xf32> -> vector<16x8xf32>
    %36 = vector.broadcast %23 : vector<1x8xf32> to vector<16x8xf32>
    %37 = arith.addf %35, %36 : vector<16x8xf32>
    %cst_12 = arith.constant 0.000000e+00 : f32
    %38 = vector.broadcast %cst_12 : f32 to vector<16x8xf32>
    %39 = arith.cmpf ogt, %37, %38 : vector<16x8xf32>
    %cst_13 = arith.constant 0.000000e+00 : f32
    %40 = vector.broadcast %cst_13 : f32 to vector<16x8xf32>
    %41 = arith.minimumf %37, %40 : vector<16x8xf32>
    %42 = math.exp %41 : vector<16x8xf32>
    %cst_14 = arith.constant 1.000000e+00 : f32
    %43 = vector.broadcast %cst_14 : f32 to vector<16x8xf32>
    %44 = arith.subf %42, %43 : vector<16x8xf32>
    %45 = arith.select %39, %37, %44 : vector<16x8xi1>, vector<16x8xf32>
    %c12 = arith.constant 12 : index
    %c0_15 = arith.constant 0 : index
    %46 = vector.load %arg1[%c12, %c0_15] : memref<63x8xf32, #tpu.memory_space<vmem>>, vector<24x8xf32>
    %c61 = arith.constant 61 : index
    %c0_16 = arith.constant 0 : index
    %47 = vector.load %arg1[%c61, %c0_16] : memref<63x8xf32, #tpu.memory_space<vmem>>, vector<1x8xf32>
    %c1_i32_17 = arith.constant 1 : i32
    %48 = tpu.dynamic_rotate %45 by %c1_i32_17 dim 0 : vector<16x8xf32>, i32 -> vector<16x8xf32>
    %c15_i32_18 = arith.constant 15 : i32
    %49 = tpu.dynamic_rotate %45 by %c15_i32_18 dim 0 : vector<16x8xf32>, i32 -> vector<16x8xf32>
    %cst_19 = arith.constant 0.000000e+00 : f32
    %50 = vector.shape_cast %19 : vector<16x1xi1> to vector<16x1xi1>
    %51 = vector.broadcast %50 : vector<16x1xi1> to vector<16x8xi1>
    %52 = vector.broadcast %cst_19 : f32 to vector<16x8xf32>
    %53 = arith.select %51, %52, %48 : vector<16x8xi1>, vector<16x8xf32>
    %cst_20 = arith.constant 0.000000e+00 : f32
    %54 = vector.shape_cast %21 : vector<16x1xi1> to vector<16x1xi1>
    %55 = vector.broadcast %54 : vector<16x1xi1> to vector<16x8xi1>
    %56 = vector.broadcast %cst_20 : f32 to vector<16x8xf32>
    %57 = arith.select %55, %56, %49 : vector<16x8xi1>, vector<16x8xf32>
    %58 = tpu.concatenate %53, %45, %57 in 1 : vector<16x8xf32>, vector<16x8xf32>, vector<16x8xf32> -> vector<16x24xf32>
    %cst_21 = arith.constant dense<0.000000e+00> : vector<16x8xf32>
    %59 = tpu.matmul %58, %46, %cst_21 {dimension_numbers = #tpu.dot_dimension_numbers<[1], [0], [0], [1], [0, 0, 1, 1], [], []>} : vector<16x24xf32>, vector<24x8xf32>, vector<16x8xf32> -> vector<16x8xf32>
    %60 = vector.broadcast %47 : vector<1x8xf32> to vector<16x8xf32>
    %61 = arith.addf %59, %60 : vector<16x8xf32>
    %cst_22 = arith.constant 0.000000e+00 : f32
    %62 = vector.broadcast %cst_22 : f32 to vector<16x8xf32>
    %63 = arith.cmpf ogt, %61, %62 : vector<16x8xf32>
    %cst_23 = arith.constant 0.000000e+00 : f32
    %64 = vector.broadcast %cst_23 : f32 to vector<16x8xf32>
    %65 = arith.minimumf %61, %64 : vector<16x8xf32>
    %66 = math.exp %65 : vector<16x8xf32>
    %cst_24 = arith.constant 1.000000e+00 : f32
    %67 = vector.broadcast %cst_24 : f32 to vector<16x8xf32>
    %68 = arith.subf %66, %67 : vector<16x8xf32>
    %69 = arith.select %63, %61, %68 : vector<16x8xi1>, vector<16x8xf32>
    %c36 = arith.constant 36 : index
    %c0_25 = arith.constant 0 : index
    %70 = vector.load %arg1[%c36, %c0_25] : memref<63x8xf32, #tpu.memory_space<vmem>>, vector<24x4xf32>
    %c62 = arith.constant 62 : index
    %c0_26 = arith.constant 0 : index
    %71 = vector.load %arg1[%c62, %c0_26] : memref<63x8xf32, #tpu.memory_space<vmem>>, vector<1x4xf32>
    %c1_i32_27 = arith.constant 1 : i32
    %72 = tpu.dynamic_rotate %69 by %c1_i32_27 dim 0 : vector<16x8xf32>, i32 -> vector<16x8xf32>
    %c15_i32_28 = arith.constant 15 : i32
    %73 = tpu.dynamic_rotate %69 by %c15_i32_28 dim 0 : vector<16x8xf32>, i32 -> vector<16x8xf32>
    %cst_29 = arith.constant 0.000000e+00 : f32
    %74 = vector.shape_cast %19 : vector<16x1xi1> to vector<16x1xi1>
    %75 = vector.broadcast %74 : vector<16x1xi1> to vector<16x8xi1>
    %76 = vector.broadcast %cst_29 : f32 to vector<16x8xf32>
    %77 = arith.select %75, %76, %72 : vector<16x8xi1>, vector<16x8xf32>
    %cst_30 = arith.constant 0.000000e+00 : f32
    %78 = vector.shape_cast %21 : vector<16x1xi1> to vector<16x1xi1>
    %79 = vector.broadcast %78 : vector<16x1xi1> to vector<16x8xi1>
    %80 = vector.broadcast %cst_30 : f32 to vector<16x8xf32>
    %81 = arith.select %79, %80, %73 : vector<16x8xi1>, vector<16x8xf32>
    %82 = tpu.concatenate %77, %69, %81 in 1 : vector<16x8xf32>, vector<16x8xf32>, vector<16x8xf32> -> vector<16x24xf32>
    %cst_31 = arith.constant dense<0.000000e+00> : vector<16x4xf32>
    %83 = tpu.matmul %82, %70, %cst_31 {dimension_numbers = #tpu.dot_dimension_numbers<[1], [0], [0], [1], [0, 0, 1, 1], [], []>} : vector<16x24xf32>, vector<24x4xf32>, vector<16x4xf32> -> vector<16x4xf32>
    %84 = vector.broadcast %71 : vector<1x4xf32> to vector<16x4xf32>
    %85 = arith.addf %83, %84 : vector<16x4xf32>
    %86 = arith.addf %85, %0 : vector<16x4xf32>
    %87 = arith.mulf %86, %0 : vector<16x4xf32>
    %c32 = arith.constant 32 : index
    %c0_32 = arith.constant 0 : index
    %88 = vector.load %arg2[%c32, %c0_32] : memref<42x128xf32, #tpu.memory_space<vmem>>, vector<4x128xf32>
    %cst_33 = arith.constant dense<0.000000e+00> : vector<16x128xf32>
    %89 = tpu.matmul %87, %88, %cst_33 {dimension_numbers = #tpu.dot_dimension_numbers<[1], [0], [0], [1], [0, 0, 1, 1], [], []>} : vector<16x4xf32>, vector<4x128xf32>, vector<16x128xf32> -> vector<16x128xf32>
    %c40 = arith.constant 40 : index
    %c0_34 = arith.constant 0 : index
    %90 = vector.load %arg2[%c40, %c0_34] : memref<42x128xf32, #tpu.memory_space<vmem>>, vector<1x128xf32>
    %91 = vector.broadcast %90 : vector<1x128xf32> to vector<16x128xf32>
    %92 = arith.addf %89, %91 : vector<16x128xf32>
    %c36_35 = arith.constant 36 : index
    %c0_36 = arith.constant 0 : index
    %93 = vector.load %arg2[%c36_35, %c0_36] : memref<42x128xf32, #tpu.memory_space<vmem>>, vector<4x128xf32>
    %cst_37 = arith.constant dense<0.000000e+00> : vector<16x128xf32>
    %94 = tpu.matmul %87, %93, %cst_37 {dimension_numbers = #tpu.dot_dimension_numbers<[1], [0], [0], [1], [0, 0, 1, 1], [], []>} : vector<16x4xf32>, vector<4x128xf32>, vector<16x128xf32> -> vector<16x128xf32>
    %95 = vector.extract_strided_slice %92 {offsets = [0, 0], sizes = [2, 128], strides = [1, 1]} : vector<16x128xf32> to vector<2x128xf32>
    %96 = vector.extract_strided_slice %94 {offsets = [14, 0], sizes = [2, 128], strides = [1, 1]} : vector<16x128xf32> to vector<2x128xf32>
    %97 = arith.addf %95, %96 : vector<2x128xf32>
    %c0_38 = arith.constant 0 : index
    %c0_39 = arith.constant 0 : index
    %c0_40 = arith.constant 0 : index
    %98 = vector.load %arg4[%c0_38, %c0_39, %c0_40] : memref<8x2x128xf32, #tpu.memory_space<vmem>>, vector<1x2x128xf32>
    %99 = vector.shape_cast %98 : vector<1x2x128xf32> to vector<2x128xf32>
    %100 = vector.shape_cast %97 : vector<2x128xf32> to vector<1x2x128xf32>
    tpu.vector_store %arg4[%c0_38, %c0_39, %c0_40], %100 {strides = array<i32>} : memref<8x2x128xf32, #tpu.memory_space<vmem>>, vector<1x2x128xf32>,
    %101 = vector.extract_strided_slice %92 {offsets = [2, 0], sizes = [2, 128], strides = [1, 1]} : vector<16x128xf32> to vector<2x128xf32>
    %102 = vector.extract_strided_slice %94 {offsets = [12, 0], sizes = [2, 128], strides = [1, 1]} : vector<16x128xf32> to vector<2x128xf32>
    %103 = arith.addf %101, %102 : vector<2x128xf32>
    %c1 = arith.constant 1 : index
    %c0_41 = arith.constant 0 : index
    %c0_42 = arith.constant 0 : index
    %104 = vector.load %arg4[%c1, %c0_41, %c0_42] : memref<8x2x128xf32, #tpu.memory_space<vmem>>, vector<1x2x128xf32>
    %105 = vector.shape_cast %104 : vector<1x2x128xf32> to vector<2x128xf32>
    %106 = vector.shape_cast %103 : vector<2x128xf32> to vector<1x2x128xf32>
    tpu.vector_store %arg4[%c1, %c0_41, %c0_42], %106 {strides = array<i32>} : memref<8x2x128xf32, #tpu.memory_space<vmem>>, vector<1x2x128xf32>,
    %107 = vector.extract_strided_slice %92 {offsets = [4, 0], sizes = [2, 128], strides = [1, 1]} : vector<16x128xf32> to vector<2x128xf32>
    %108 = vector.extract_strided_slice %94 {offsets = [10, 0], sizes = [2, 128], strides = [1, 1]} : vector<16x128xf32> to vector<2x128xf32>
    %109 = arith.addf %107, %108 : vector<2x128xf32>
    %c2 = arith.constant 2 : index
    %c0_43 = arith.constant 0 : index
    %c0_44 = arith.constant 0 : index
    %110 = vector.load %arg4[%c2, %c0_43, %c0_44] : memref<8x2x128xf32, #tpu.memory_space<vmem>>, vector<1x2x128xf32>
    %111 = vector.shape_cast %110 : vector<1x2x128xf32> to vector<2x128xf32>
    %112 = vector.shape_cast %109 : vector<2x128xf32> to vector<1x2x128xf32>
    tpu.vector_store %arg4[%c2, %c0_43, %c0_44], %112 {strides = array<i32>} : memref<8x2x128xf32, #tpu.memory_space<vmem>>, vector<1x2x128xf32>,
    %113 = vector.extract_strided_slice %92 {offsets = [6, 0], sizes = [2, 128], strides = [1, 1]} : vector<16x128xf32> to vector<2x128xf32>
    %114 = vector.extract_strided_slice %94 {offsets = [8, 0], sizes = [2, 128], strides = [1, 1]} : vector<16x128xf32> to vector<2x128xf32>
    %115 = arith.addf %113, %114 : vector<2x128xf32>
    %c3 = arith.constant 3 : index
    %c0_45 = arith.constant 0 : index
    %c0_46 = arith.constant 0 : index
    %116 = vector.load %arg4[%c3, %c0_45, %c0_46] : memref<8x2x128xf32, #tpu.memory_space<vmem>>, vector<1x2x128xf32>
    %117 = vector.shape_cast %116 : vector<1x2x128xf32> to vector<2x128xf32>
    %118 = vector.shape_cast %115 : vector<2x128xf32> to vector<1x2x128xf32>
    tpu.vector_store %arg4[%c3, %c0_45, %c0_46], %118 {strides = array<i32>} : memref<8x2x128xf32, #tpu.memory_space<vmem>>, vector<1x2x128xf32>,
    %119 = vector.extract_strided_slice %92 {offsets = [8, 0], sizes = [2, 128], strides = [1, 1]} : vector<16x128xf32> to vector<2x128xf32>
    %120 = vector.extract_strided_slice %94 {offsets = [6, 0], sizes = [2, 128], strides = [1, 1]} : vector<16x128xf32> to vector<2x128xf32>
    %121 = arith.addf %119, %120 : vector<2x128xf32>
    %c4 = arith.constant 4 : index
    %c0_47 = arith.constant 0 : index
    %c0_48 = arith.constant 0 : index
    %122 = vector.load %arg4[%c4, %c0_47, %c0_48] : memref<8x2x128xf32, #tpu.memory_space<vmem>>, vector<1x2x128xf32>
    %123 = vector.shape_cast %122 : vector<1x2x128xf32> to vector<2x128xf32>
    %124 = vector.shape_cast %121 : vector<2x128xf32> to vector<1x2x128xf32>
    tpu.vector_store %arg4[%c4, %c0_47, %c0_48], %124 {strides = array<i32>} : memref<8x2x128xf32, #tpu.memory_space<vmem>>, vector<1x2x128xf32>,
    %125 = vector.extract_strided_slice %92 {offsets = [10, 0], sizes = [2, 128], strides = [1, 1]} : vector<16x128xf32> to vector<2x128xf32>
    %126 = vector.extract_strided_slice %94 {offsets = [4, 0], sizes = [2, 128], strides = [1, 1]} : vector<16x128xf32> to vector<2x128xf32>
    %127 = arith.addf %125, %126 : vector<2x128xf32>
    %c5 = arith.constant 5 : index
    %c0_49 = arith.constant 0 : index
    %c0_50 = arith.constant 0 : index
    %128 = vector.load %arg4[%c5, %c0_49, %c0_50] : memref<8x2x128xf32, #tpu.memory_space<vmem>>, vector<1x2x128xf32>
    %129 = vector.shape_cast %128 : vector<1x2x128xf32> to vector<2x128xf32>
    %130 = vector.shape_cast %127 : vector<2x128xf32> to vector<1x2x128xf32>
    tpu.vector_store %arg4[%c5, %c0_49, %c0_50], %130 {strides = array<i32>} : memref<8x2x128xf32, #tpu.memory_space<vmem>>, vector<1x2x128xf32>,
    %131 = vector.extract_strided_slice %92 {offsets = [12, 0], sizes = [2, 128], strides = [1, 1]} : vector<16x128xf32> to vector<2x128xf32>
    %132 = vector.extract_strided_slice %94 {offsets = [2, 0], sizes = [2, 128], strides = [1, 1]} : vector<16x128xf32> to vector<2x128xf32>
    %133 = arith.addf %131, %132 : vector<2x128xf32>
    %c6 = arith.constant 6 : index
    %c0_51 = arith.constant 0 : index
    %c0_52 = arith.constant 0 : index
    %134 = vector.load %arg4[%c6, %c0_51, %c0_52] : memref<8x2x128xf32, #tpu.memory_space<vmem>>, vector<1x2x128xf32>
    %135 = vector.shape_cast %134 : vector<1x2x128xf32> to vector<2x128xf32>
    %136 = vector.shape_cast %133 : vector<2x128xf32> to vector<1x2x128xf32>
    tpu.vector_store %arg4[%c6, %c0_51, %c0_52], %136 {strides = array<i32>} : memref<8x2x128xf32, #tpu.memory_space<vmem>>, vector<1x2x128xf32>,
    %137 = vector.extract_strided_slice %92 {offsets = [14, 0], sizes = [2, 128], strides = [1, 1]} : vector<16x128xf32> to vector<2x128xf32>
    %138 = vector.extract_strided_slice %94 {offsets = [0, 0], sizes = [2, 128], strides = [1, 1]} : vector<16x128xf32> to vector<2x128xf32>
    %139 = arith.addf %137, %138 : vector<2x128xf32>
    %c7 = arith.constant 7 : index
    %c0_53 = arith.constant 0 : index
    %c0_54 = arith.constant 0 : index
    %140 = vector.load %arg4[%c7, %c0_53, %c0_54] : memref<8x2x128xf32, #tpu.memory_space<vmem>>, vector<1x2x128xf32>
    %141 = vector.shape_cast %140 : vector<1x2x128xf32> to vector<2x128xf32>
    %142 = vector.shape_cast %139 : vector<2x128xf32> to vector<1x2x128xf32>
    tpu.vector_store %arg4[%c7, %c0_53, %c0_54], %142 {strides = array<i32>} : memref<8x2x128xf32, #tpu.memory_space<vmem>>, vector<1x2x128xf32>,
    %c0_55 = arith.constant 0 : index
    %c0_56 = arith.constant 0 : index
    %143 = vector.load %arg2[%c0_55, %c0_56] : memref<42x128xf32, #tpu.memory_space<vmem>>, vector<32x128xf32>
    %cst_57 = arith.constant 0.000000e+00 : f32
    %144 = vector.broadcast %cst_57 : f32 to vector<2x32xf32>
    %c0_i32_58 = arith.constant 0 : i32
    %cst_59 = arith.constant dense<0.000000e+00> : vector<2x128xf32>
    %145 = tpu.matmul %144, %143, %cst_59 {dimension_numbers = #tpu.dot_dimension_numbers<[1], [0], [0], [1], [0, 0, 1, 1], [], []>} : vector<2x32xf32>, vector<32x128xf32>, vector<2x128xf32> -> vector<2x128xf32>
    %146 = arith.index_cast %c0_i32_58 : i32 to index
    %c0_60 = arith.constant 0 : index
    %c0_61 = arith.constant 0 : index
    %147 = vector.load %arg4[%146, %c0_60, %c0_61] : memref<8x2x128xf32, #tpu.memory_space<vmem>>, vector<1x2x128xf32>
    %148 = vector.shape_cast %147 : vector<1x2x128xf32> to vector<2x128xf32>
    %149 = arith.addf %145, %148 : vector<2x128xf32>
    %150 = arith.negf %149 : vector<2x128xf32>
    %151 = math.exp %150 : vector<2x128xf32>
    %cst_62 = arith.constant 1.000000e+00 : f32
    %152 = vector.broadcast %cst_62 : f32 to vector<2x128xf32>
    %153 = arith.addf %152, %151 : vector<2x128xf32>
    %154 = arith.divf %152, %153 : vector<2x128xf32>
    %155 = vector.extract_strided_slice %149 {offsets = [0, 64], sizes = [2, 32], strides = [1, 1]} : vector<2x128xf32> to vector<2x32xf32>
    %156 = math.tanh %155 : vector<2x32xf32>
    %157 = vector.extract_strided_slice %154 {offsets = [0, 32], sizes = [2, 32], strides = [1, 1]} : vector<2x128xf32> to vector<2x32xf32>
    %158 = arith.mulf %157, %144 : vector<2x32xf32>
    %159 = vector.extract_strided_slice %154 {offsets = [0, 0], sizes = [2, 32], strides = [1, 1]} : vector<2x128xf32> to vector<2x32xf32>
    %160 = arith.mulf %159, %156 : vector<2x32xf32>
    %161 = arith.addf %158, %160 : vector<2x32xf32>
    %162 = vector.extract_strided_slice %154 {offsets = [0, 96], sizes = [2, 32], strides = [1, 1]} : vector<2x128xf32> to vector<2x32xf32>
    %163 = math.tanh %161 : vector<2x32xf32>
    %164 = arith.mulf %162, %163 : vector<2x32xf32>
    %165 = arith.index_cast %c0_i32_58 : i32 to index
    %c0_63 = arith.constant 0 : index
    %c0_64 = arith.constant 0 : index
    %166 = vector.load %arg5[%165, %c0_63, %c0_64] : memref<8x2x32xf32, #tpu.memory_space<vmem>>, vector<1x2x32xf32>
    %167 = vector.shape_cast %166 : vector<1x2x32xf32> to vector<2x32xf32>
    %168 = vector.shape_cast %164 : vector<2x32xf32> to vector<1x2x32xf32>
    tpu.vector_store %arg5[%165, %c0_63, %c0_64], %168 {strides = array<i32>} : memref<8x2x32xf32, #tpu.memory_space<vmem>>, vector<1x2x32xf32>,
    %c1_i32_65 = arith.constant 1 : i32
    %cst_66 = arith.constant dense<0.000000e+00> : vector<2x128xf32>
    %169 = tpu.matmul %164, %143, %cst_66 {dimension_numbers = #tpu.dot_dimension_numbers<[1], [0], [0], [1], [0, 0, 1, 1], [], []>} : vector<2x32xf32>, vector<32x128xf32>, vector<2x128xf32> -> vector<2x128xf32>
    %170 = arith.index_cast %c1_i32_65 : i32 to index
    %c0_67 = arith.constant 0 : index
    %c0_68 = arith.constant 0 : index
    %171 = vector.load %arg4[%170, %c0_67, %c0_68] : memref<8x2x128xf32, #tpu.memory_space<vmem>>, vector<1x2x128xf32>
    %172 = vector.shape_cast %171 : vector<1x2x128xf32> to vector<2x128xf32>
    %173 = arith.addf %169, %172 : vector<2x128xf32>
    %174 = arith.negf %173 : vector<2x128xf32>
    %175 = math.exp %174 : vector<2x128xf32>
    %cst_69 = arith.constant 1.000000e+00 : f32
    %176 = vector.broadcast %cst_69 : f32 to vector<2x128xf32>
    %177 = arith.addf %176, %175 : vector<2x128xf32>
    %178 = arith.divf %176, %177 : vector<2x128xf32>
    %179 = vector.extract_strided_slice %173 {offsets = [0, 64], sizes = [2, 32], strides = [1, 1]} : vector<2x128xf32> to vector<2x32xf32>
    %180 = math.tanh %179 : vector<2x32xf32>
    %181 = vector.extract_strided_slice %178 {offsets = [0, 32], sizes = [2, 32], strides = [1, 1]} : vector<2x128xf32> to vector<2x32xf32>
    %182 = arith.mulf %181, %161 : vector<2x32xf32>
    %183 = vector.extract_strided_slice %178 {offsets = [0, 0], sizes = [2, 32], strides = [1, 1]} : vector<2x128xf32> to vector<2x32xf32>
    %184 = arith.mulf %183, %180 : vector<2x32xf32>
    %185 = arith.addf %182, %184 : vector<2x32xf32>
    %186 = vector.extract_strided_slice %178 {offsets = [0, 96], sizes = [2, 32], strides = [1, 1]} : vector<2x128xf32> to vector<2x32xf32>
    %187 = math.tanh %185 : vector<2x32xf32>
    %188 = arith.mulf %186, %187 : vector<2x32xf32>
    %189 = arith.index_cast %c1_i32_65 : i32 to index
    %c0_70 = arith.constant 0 : index
    %c0_71 = arith.constant 0 : index
    %190 = vector.load %arg5[%189, %c0_70, %c0_71] : memref<8x2x32xf32, #tpu.memory_space<vmem>>, vector<1x2x32xf32>
    %191 = vector.shape_cast %190 : vector<1x2x32xf32> to vector<2x32xf32>
    %192 = vector.shape_cast %188 : vector<2x32xf32> to vector<1x2x32xf32>
    tpu.vector_store %arg5[%189, %c0_70, %c0_71], %192 {strides = array<i32>} : memref<8x2x32xf32, #tpu.memory_space<vmem>>, vector<1x2x32xf32>,
    %c2_i32_72 = arith.constant 2 : i32
    %cst_73 = arith.constant dense<0.000000e+00> : vector<2x128xf32>
    %193 = tpu.matmul %188, %143, %cst_73 {dimension_numbers = #tpu.dot_dimension_numbers<[1], [0], [0], [1], [0, 0, 1, 1], [], []>} : vector<2x32xf32>, vector<32x128xf32>, vector<2x128xf32> -> vector<2x128xf32>
    %194 = arith.index_cast %c2_i32_72 : i32 to index
    %c0_74 = arith.constant 0 : index
    %c0_75 = arith.constant 0 : index
    %195 = vector.load %arg4[%194, %c0_74, %c0_75] : memref<8x2x128xf32, #tpu.memory_space<vmem>>, vector<1x2x128xf32>
    %196 = vector.shape_cast %195 : vector<1x2x128xf32> to vector<2x128xf32>
    %197 = arith.addf %193, %196 : vector<2x128xf32>
    %198 = arith.negf %197 : vector<2x128xf32>
    %199 = math.exp %198 : vector<2x128xf32>
    %cst_76 = arith.constant 1.000000e+00 : f32
    %200 = vector.broadcast %cst_76 : f32 to vector<2x128xf32>
    %201 = arith.addf %200, %199 : vector<2x128xf32>
    %202 = arith.divf %200, %201 : vector<2x128xf32>
    %203 = vector.extract_strided_slice %197 {offsets = [0, 64], sizes = [2, 32], strides = [1, 1]} : vector<2x128xf32> to vector<2x32xf32>
    %204 = math.tanh %203 : vector<2x32xf32>
    %205 = vector.extract_strided_slice %202 {offsets = [0, 32], sizes = [2, 32], strides = [1, 1]} : vector<2x128xf32> to vector<2x32xf32>
    %206 = arith.mulf %205, %185 : vector<2x32xf32>
    %207 = vector.extract_strided_slice %202 {offsets = [0, 0], sizes = [2, 32], strides = [1, 1]} : vector<2x128xf32> to vector<2x32xf32>
    %208 = arith.mulf %207, %204 : vector<2x32xf32>
    %209 = arith.addf %206, %208 : vector<2x32xf32>
    %210 = vector.extract_strided_slice %202 {offsets = [0, 96], sizes = [2, 32], strides = [1, 1]} : vector<2x128xf32> to vector<2x32xf32>
    %211 = math.tanh %209 : vector<2x32xf32>
    %212 = arith.mulf %210, %211 : vector<2x32xf32>
    %213 = arith.index_cast %c2_i32_72 : i32 to index
    %c0_77 = arith.constant 0 : index
    %c0_78 = arith.constant 0 : index
    %214 = vector.load %arg5[%213, %c0_77, %c0_78] : memref<8x2x32xf32, #tpu.memory_space<vmem>>, vector<1x2x32xf32>
    %215 = vector.shape_cast %214 : vector<1x2x32xf32> to vector<2x32xf32>
    %216 = vector.shape_cast %212 : vector<2x32xf32> to vector<1x2x32xf32>
    tpu.vector_store %arg5[%213, %c0_77, %c0_78], %216 {strides = array<i32>} : memref<8x2x32xf32, #tpu.memory_space<vmem>>, vector<1x2x32xf32>,
    %c3_i32 = arith.constant 3 : i32
    %cst_79 = arith.constant dense<0.000000e+00> : vector<2x128xf32>
    %217 = tpu.matmul %212, %143, %cst_79 {dimension_numbers = #tpu.dot_dimension_numbers<[1], [0], [0], [1], [0, 0, 1, 1], [], []>} : vector<2x32xf32>, vector<32x128xf32>, vector<2x128xf32> -> vector<2x128xf32>
    %218 = arith.index_cast %c3_i32 : i32 to index
    %c0_80 = arith.constant 0 : index
    %c0_81 = arith.constant 0 : index
    %219 = vector.load %arg4[%218, %c0_80, %c0_81] : memref<8x2x128xf32, #tpu.memory_space<vmem>>, vector<1x2x128xf32>
    %220 = vector.shape_cast %219 : vector<1x2x128xf32> to vector<2x128xf32>
    %221 = arith.addf %217, %220 : vector<2x128xf32>
    %222 = arith.negf %221 : vector<2x128xf32>
    %223 = math.exp %222 : vector<2x128xf32>
    %cst_82 = arith.constant 1.000000e+00 : f32
    %224 = vector.broadcast %cst_82 : f32 to vector<2x128xf32>
    %225 = arith.addf %224, %223 : vector<2x128xf32>
    %226 = arith.divf %224, %225 : vector<2x128xf32>
    %227 = vector.extract_strided_slice %221 {offsets = [0, 64], sizes = [2, 32], strides = [1, 1]} : vector<2x128xf32> to vector<2x32xf32>
    %228 = math.tanh %227 : vector<2x32xf32>
    %229 = vector.extract_strided_slice %226 {offsets = [0, 32], sizes = [2, 32], strides = [1, 1]} : vector<2x128xf32> to vector<2x32xf32>
    %230 = arith.mulf %229, %209 : vector<2x32xf32>
    %231 = vector.extract_strided_slice %226 {offsets = [0, 0], sizes = [2, 32], strides = [1, 1]} : vector<2x128xf32> to vector<2x32xf32>
    %232 = arith.mulf %231, %228 : vector<2x32xf32>
    %233 = arith.addf %230, %232 : vector<2x32xf32>
    %234 = vector.extract_strided_slice %226 {offsets = [0, 96], sizes = [2, 32], strides = [1, 1]} : vector<2x128xf32> to vector<2x32xf32>
    %235 = math.tanh %233 : vector<2x32xf32>
    %236 = arith.mulf %234, %235 : vector<2x32xf32>
    %237 = arith.index_cast %c3_i32 : i32 to index
    %c0_83 = arith.constant 0 : index
    %c0_84 = arith.constant 0 : index
    %238 = vector.load %arg5[%237, %c0_83, %c0_84] : memref<8x2x32xf32, #tpu.memory_space<vmem>>, vector<1x2x32xf32>
    %239 = vector.shape_cast %238 : vector<1x2x32xf32> to vector<2x32xf32>
    %240 = vector.shape_cast %236 : vector<2x32xf32> to vector<1x2x32xf32>
    tpu.vector_store %arg5[%237, %c0_83, %c0_84], %240 {strides = array<i32>} : memref<8x2x32xf32, #tpu.memory_space<vmem>>, vector<1x2x32xf32>,
    %c4_i32 = arith.constant 4 : i32
    %cst_85 = arith.constant dense<0.000000e+00> : vector<2x128xf32>
    %241 = tpu.matmul %236, %143, %cst_85 {dimension_numbers = #tpu.dot_dimension_numbers<[1], [0], [0], [1], [0, 0, 1, 1], [], []>} : vector<2x32xf32>, vector<32x128xf32>, vector<2x128xf32> -> vector<2x128xf32>
    %242 = arith.index_cast %c4_i32 : i32 to index
    %c0_86 = arith.constant 0 : index
    %c0_87 = arith.constant 0 : index
    %243 = vector.load %arg4[%242, %c0_86, %c0_87] : memref<8x2x128xf32, #tpu.memory_space<vmem>>, vector<1x2x128xf32>
    %244 = vector.shape_cast %243 : vector<1x2x128xf32> to vector<2x128xf32>
    %245 = arith.addf %241, %244 : vector<2x128xf32>
    %246 = arith.negf %245 : vector<2x128xf32>
    %247 = math.exp %246 : vector<2x128xf32>
    %cst_88 = arith.constant 1.000000e+00 : f32
    %248 = vector.broadcast %cst_88 : f32 to vector<2x128xf32>
    %249 = arith.addf %248, %247 : vector<2x128xf32>
    %250 = arith.divf %248, %249 : vector<2x128xf32>
    %251 = vector.extract_strided_slice %245 {offsets = [0, 64], sizes = [2, 32], strides = [1, 1]} : vector<2x128xf32> to vector<2x32xf32>
    %252 = math.tanh %251 : vector<2x32xf32>
    %253 = vector.extract_strided_slice %250 {offsets = [0, 32], sizes = [2, 32], strides = [1, 1]} : vector<2x128xf32> to vector<2x32xf32>
    %254 = arith.mulf %253, %233 : vector<2x32xf32>
    %255 = vector.extract_strided_slice %250 {offsets = [0, 0], sizes = [2, 32], strides = [1, 1]} : vector<2x128xf32> to vector<2x32xf32>
    %256 = arith.mulf %255, %252 : vector<2x32xf32>
    %257 = arith.addf %254, %256 : vector<2x32xf32>
    %258 = vector.extract_strided_slice %250 {offsets = [0, 96], sizes = [2, 32], strides = [1, 1]} : vector<2x128xf32> to vector<2x32xf32>
    %259 = math.tanh %257 : vector<2x32xf32>
    %260 = arith.mulf %258, %259 : vector<2x32xf32>
    %261 = arith.index_cast %c4_i32 : i32 to index
    %c0_89 = arith.constant 0 : index
    %c0_90 = arith.constant 0 : index
    %262 = vector.load %arg5[%261, %c0_89, %c0_90] : memref<8x2x32xf32, #tpu.memory_space<vmem>>, vector<1x2x32xf32>
    %263 = vector.shape_cast %262 : vector<1x2x32xf32> to vector<2x32xf32>
    %264 = vector.shape_cast %260 : vector<2x32xf32> to vector<1x2x32xf32>
    tpu.vector_store %arg5[%261, %c0_89, %c0_90], %264 {strides = array<i32>} : memref<8x2x32xf32, #tpu.memory_space<vmem>>, vector<1x2x32xf32>,
    %c5_i32 = arith.constant 5 : i32
    %cst_91 = arith.constant dense<0.000000e+00> : vector<2x128xf32>
    %265 = tpu.matmul %260, %143, %cst_91 {dimension_numbers = #tpu.dot_dimension_numbers<[1], [0], [0], [1], [0, 0, 1, 1], [], []>} : vector<2x32xf32>, vector<32x128xf32>, vector<2x128xf32> -> vector<2x128xf32>
    %266 = arith.index_cast %c5_i32 : i32 to index
    %c0_92 = arith.constant 0 : index
    %c0_93 = arith.constant 0 : index
    %267 = vector.load %arg4[%266, %c0_92, %c0_93] : memref<8x2x128xf32, #tpu.memory_space<vmem>>, vector<1x2x128xf32>
    %268 = vector.shape_cast %267 : vector<1x2x128xf32> to vector<2x128xf32>
    %269 = arith.addf %265, %268 : vector<2x128xf32>
    %270 = arith.negf %269 : vector<2x128xf32>
    %271 = math.exp %270 : vector<2x128xf32>
    %cst_94 = arith.constant 1.000000e+00 : f32
    %272 = vector.broadcast %cst_94 : f32 to vector<2x128xf32>
    %273 = arith.addf %272, %271 : vector<2x128xf32>
    %274 = arith.divf %272, %273 : vector<2x128xf32>
    %275 = vector.extract_strided_slice %269 {offsets = [0, 64], sizes = [2, 32], strides = [1, 1]} : vector<2x128xf32> to vector<2x32xf32>
    %276 = math.tanh %275 : vector<2x32xf32>
    %277 = vector.extract_strided_slice %274 {offsets = [0, 32], sizes = [2, 32], strides = [1, 1]} : vector<2x128xf32> to vector<2x32xf32>
    %278 = arith.mulf %277, %257 : vector<2x32xf32>
    %279 = vector.extract_strided_slice %274 {offsets = [0, 0], sizes = [2, 32], strides = [1, 1]} : vector<2x128xf32> to vector<2x32xf32>
    %280 = arith.mulf %279, %276 : vector<2x32xf32>
    %281 = arith.addf %278, %280 : vector<2x32xf32>
    %282 = vector.extract_strided_slice %274 {offsets = [0, 96], sizes = [2, 32], strides = [1, 1]} : vector<2x128xf32> to vector<2x32xf32>
    %283 = math.tanh %281 : vector<2x32xf32>
    %284 = arith.mulf %282, %283 : vector<2x32xf32>
    %285 = arith.index_cast %c5_i32 : i32 to index
    %c0_95 = arith.constant 0 : index
    %c0_96 = arith.constant 0 : index
    %286 = vector.load %arg5[%285, %c0_95, %c0_96] : memref<8x2x32xf32, #tpu.memory_space<vmem>>, vector<1x2x32xf32>
    %287 = vector.shape_cast %286 : vector<1x2x32xf32> to vector<2x32xf32>
    %288 = vector.shape_cast %284 : vector<2x32xf32> to vector<1x2x32xf32>
    tpu.vector_store %arg5[%285, %c0_95, %c0_96], %288 {strides = array<i32>} : memref<8x2x32xf32, #tpu.memory_space<vmem>>, vector<1x2x32xf32>,
    %c6_i32 = arith.constant 6 : i32
    %cst_97 = arith.constant dense<0.000000e+00> : vector<2x128xf32>
    %289 = tpu.matmul %284, %143, %cst_97 {dimension_numbers = #tpu.dot_dimension_numbers<[1], [0], [0], [1], [0, 0, 1, 1], [], []>} : vector<2x32xf32>, vector<32x128xf32>, vector<2x128xf32> -> vector<2x128xf32>
    %290 = arith.index_cast %c6_i32 : i32 to index
    %c0_98 = arith.constant 0 : index
    %c0_99 = arith.constant 0 : index
    %291 = vector.load %arg4[%290, %c0_98, %c0_99] : memref<8x2x128xf32, #tpu.memory_space<vmem>>, vector<1x2x128xf32>
    %292 = vector.shape_cast %291 : vector<1x2x128xf32> to vector<2x128xf32>
    %293 = arith.addf %289, %292 : vector<2x128xf32>
    %294 = arith.negf %293 : vector<2x128xf32>
    %295 = math.exp %294 : vector<2x128xf32>
    %cst_100 = arith.constant 1.000000e+00 : f32
    %296 = vector.broadcast %cst_100 : f32 to vector<2x128xf32>
    %297 = arith.addf %296, %295 : vector<2x128xf32>
    %298 = arith.divf %296, %297 : vector<2x128xf32>
    %299 = vector.extract_strided_slice %293 {offsets = [0, 64], sizes = [2, 32], strides = [1, 1]} : vector<2x128xf32> to vector<2x32xf32>
    %300 = math.tanh %299 : vector<2x32xf32>
    %301 = vector.extract_strided_slice %298 {offsets = [0, 32], sizes = [2, 32], strides = [1, 1]} : vector<2x128xf32> to vector<2x32xf32>
    %302 = arith.mulf %301, %281 : vector<2x32xf32>
    %303 = vector.extract_strided_slice %298 {offsets = [0, 0], sizes = [2, 32], strides = [1, 1]} : vector<2x128xf32> to vector<2x32xf32>
    %304 = arith.mulf %303, %300 : vector<2x32xf32>
    %305 = arith.addf %302, %304 : vector<2x32xf32>
    %306 = vector.extract_strided_slice %298 {offsets = [0, 96], sizes = [2, 32], strides = [1, 1]} : vector<2x128xf32> to vector<2x32xf32>
    %307 = math.tanh %305 : vector<2x32xf32>
    %308 = arith.mulf %306, %307 : vector<2x32xf32>
    %309 = arith.index_cast %c6_i32 : i32 to index
    %c0_101 = arith.constant 0 : index
    %c0_102 = arith.constant 0 : index
    %310 = vector.load %arg5[%309, %c0_101, %c0_102] : memref<8x2x32xf32, #tpu.memory_space<vmem>>, vector<1x2x32xf32>
    %311 = vector.shape_cast %310 : vector<1x2x32xf32> to vector<2x32xf32>
    %312 = vector.shape_cast %308 : vector<2x32xf32> to vector<1x2x32xf32>
    tpu.vector_store %arg5[%309, %c0_101, %c0_102], %312 {strides = array<i32>} : memref<8x2x32xf32, #tpu.memory_space<vmem>>, vector<1x2x32xf32>,
    %c7_i32 = arith.constant 7 : i32
    %cst_103 = arith.constant dense<0.000000e+00> : vector<2x128xf32>
    %313 = tpu.matmul %308, %143, %cst_103 {dimension_numbers = #tpu.dot_dimension_numbers<[1], [0], [0], [1], [0, 0, 1, 1], [], []>} : vector<2x32xf32>, vector<32x128xf32>, vector<2x128xf32> -> vector<2x128xf32>
    %314 = arith.index_cast %c7_i32 : i32 to index
    %c0_104 = arith.constant 0 : index
    %c0_105 = arith.constant 0 : index
    %315 = vector.load %arg4[%314, %c0_104, %c0_105] : memref<8x2x128xf32, #tpu.memory_space<vmem>>, vector<1x2x128xf32>
    %316 = vector.shape_cast %315 : vector<1x2x128xf32> to vector<2x128xf32>
    %317 = arith.addf %313, %316 : vector<2x128xf32>
    %318 = arith.negf %317 : vector<2x128xf32>
    %319 = math.exp %318 : vector<2x128xf32>
    %cst_106 = arith.constant 1.000000e+00 : f32
    %320 = vector.broadcast %cst_106 : f32 to vector<2x128xf32>
    %321 = arith.addf %320, %319 : vector<2x128xf32>
    %322 = arith.divf %320, %321 : vector<2x128xf32>
    %323 = vector.extract_strided_slice %317 {offsets = [0, 64], sizes = [2, 32], strides = [1, 1]} : vector<2x128xf32> to vector<2x32xf32>
    %324 = math.tanh %323 : vector<2x32xf32>
    %325 = vector.extract_strided_slice %322 {offsets = [0, 32], sizes = [2, 32], strides = [1, 1]} : vector<2x128xf32> to vector<2x32xf32>
    %326 = arith.mulf %325, %305 : vector<2x32xf32>
    %327 = vector.extract_strided_slice %322 {offsets = [0, 0], sizes = [2, 32], strides = [1, 1]} : vector<2x128xf32> to vector<2x32xf32>
    %328 = arith.mulf %327, %324 : vector<2x32xf32>
    %329 = arith.addf %326, %328 : vector<2x32xf32>
    %330 = vector.extract_strided_slice %322 {offsets = [0, 96], sizes = [2, 32], strides = [1, 1]} : vector<2x128xf32> to vector<2x32xf32>
    %331 = math.tanh %329 : vector<2x32xf32>
    %332 = arith.mulf %330, %331 : vector<2x32xf32>
    %333 = arith.index_cast %c7_i32 : i32 to index
    %c0_107 = arith.constant 0 : index
    %c0_108 = arith.constant 0 : index
    %334 = vector.load %arg5[%333, %c0_107, %c0_108] : memref<8x2x32xf32, #tpu.memory_space<vmem>>, vector<1x2x32xf32>
    %335 = vector.shape_cast %334 : vector<1x2x32xf32> to vector<2x32xf32>
    %336 = vector.shape_cast %332 : vector<2x32xf32> to vector<1x2x32xf32>
    tpu.vector_store %arg5[%333, %c0_107, %c0_108], %336 {strides = array<i32>} : memref<8x2x32xf32, #tpu.memory_space<vmem>>, vector<1x2x32xf32>,
    %c8_i32 = arith.constant 8 : i32
    %c0_109 = arith.constant 0 : index
    %c0_110 = arith.constant 0 : index
    %c0_111 = arith.constant 0 : index
    %337 = vector.load %arg5[%c0_109, %c0_110, %c0_111] : memref<8x2x32xf32, #tpu.memory_space<vmem>>, vector<8x2x32xf32>
    %c41 = arith.constant 41 : index
    %c0_112 = arith.constant 0 : index
    %338 = vector.load %arg2[%c41, %c0_112] : memref<42x128xf32, #tpu.memory_space<vmem>>, vector<1x32xf32>
    %c41_113 = arith.constant 41 : index
    %c32_114 = arith.constant 32 : index
    %339 = vector.load %arg2[%c41_113, %c32_114] : memref<42x128xf32, #tpu.memory_space<vmem>>, vector<1x1xf32>
    %340 = vector.shape_cast %338 : vector<1x32xf32> to vector<1x1x32xf32>
    %341 = vector.broadcast %340 : vector<1x1x32xf32> to vector<8x2x32xf32>
    %342 = arith.mulf %337, %341 : vector<8x2x32xf32>
    %343 = vector.extract_strided_slice %342 {offsets = [0, 0, 0], sizes = [8, 2, 16], strides = [1, 1, 1]} : vector<8x2x32xf32> to vector<8x2x16xf32>
    %cst_115 = arith.constant dense<0.000000e+00> : vector<8x2xf32>
    %344 = vector.multi_reduction <add>, %343, %cst_115 [2] : vector<8x2x16xf32> to vector<8x2xf32>
    %345 = vector.shape_cast %344 : vector<8x2xf32> to vector<8x2x1xf32>
    %346 = vector.extract_strided_slice %342 {offsets = [0, 0, 16], sizes = [8, 2, 16], strides = [1, 1, 1]} : vector<8x2x32xf32> to vector<8x2x16xf32>
    %cst_116 = arith.constant dense<0.000000e+00> : vector<8x2xf32>
    %347 = vector.multi_reduction <add>, %346, %cst_116 [2] : vector<8x2x16xf32> to vector<8x2xf32>
    %348 = vector.shape_cast %347 : vector<8x2xf32> to vector<8x2x1xf32>
    %349 = vector.extract_strided_slice %345 {offsets = [0, 0, 0], sizes = [1, 2, 1], strides = [1, 1, 1]} : vector<8x2x1xf32> to vector<1x2x1xf32>
    %350 = vector.shape_cast %349 : vector<1x2x1xf32> to vector<2x1xf32>
    %351 = vector.extract_strided_slice %348 {offsets = [7, 0, 0], sizes = [1, 2, 1], strides = [1, 1, 1]} : vector<8x2x1xf32> to vector<1x2x1xf32>
    %352 = vector.shape_cast %351 : vector<1x2x1xf32> to vector<2x1xf32>
    %353 = arith.addf %350, %352 : vector<2x1xf32>
    %354 = vector.broadcast %339 : vector<1x1xf32> to vector<2x1xf32>
    %355 = arith.addf %353, %354 : vector<2x1xf32>
    %c0_117 = arith.constant 0 : index
    %c0_118 = arith.constant 0 : index
    %c0_119 = arith.constant 0 : index
    %356 = vector.load %arg3[%c0_117, %c0_118, %c0_119] : memref<8x2x1xf32, #tpu.memory_space<vmem>>, vector<1x2x1xf32>
    %357 = vector.shape_cast %356 : vector<1x2x1xf32> to vector<2x1xf32>
    %358 = vector.shape_cast %355 : vector<2x1xf32> to vector<1x2x1xf32>
    tpu.vector_store %arg3[%c0_117, %c0_118, %c0_119], %358 {strides = array<i32>} : memref<8x2x1xf32, #tpu.memory_space<vmem>>, vector<1x2x1xf32>,
    %359 = vector.extract_strided_slice %345 {offsets = [1, 0, 0], sizes = [1, 2, 1], strides = [1, 1, 1]} : vector<8x2x1xf32> to vector<1x2x1xf32>
    %360 = vector.shape_cast %359 : vector<1x2x1xf32> to vector<2x1xf32>
    %361 = vector.extract_strided_slice %348 {offsets = [6, 0, 0], sizes = [1, 2, 1], strides = [1, 1, 1]} : vector<8x2x1xf32> to vector<1x2x1xf32>
    %362 = vector.shape_cast %361 : vector<1x2x1xf32> to vector<2x1xf32>
    %363 = arith.addf %360, %362 : vector<2x1xf32>
    %364 = vector.broadcast %339 : vector<1x1xf32> to vector<2x1xf32>
    %365 = arith.addf %363, %364 : vector<2x1xf32>
    %c1_120 = arith.constant 1 : index
    %c0_121 = arith.constant 0 : index
    %c0_122 = arith.constant 0 : index
    %366 = vector.load %arg3[%c1_120, %c0_121, %c0_122] : memref<8x2x1xf32, #tpu.memory_space<vmem>>, vector<1x2x1xf32>
    %367 = vector.shape_cast %366 : vector<1x2x1xf32> to vector<2x1xf32>
    %368 = vector.shape_cast %365 : vector<2x1xf32> to vector<1x2x1xf32>
    tpu.vector_store %arg3[%c1_120, %c0_121, %c0_122], %368 {strides = array<i32>} : memref<8x2x1xf32, #tpu.memory_space<vmem>>, vector<1x2x1xf32>,
    %369 = vector.extract_strided_slice %345 {offsets = [2, 0, 0], sizes = [1, 2, 1], strides = [1, 1, 1]} : vector<8x2x1xf32> to vector<1x2x1xf32>
    %370 = vector.shape_cast %369 : vector<1x2x1xf32> to vector<2x1xf32>
    %371 = vector.extract_strided_slice %348 {offsets = [5, 0, 0], sizes = [1, 2, 1], strides = [1, 1, 1]} : vector<8x2x1xf32> to vector<1x2x1xf32>
    %372 = vector.shape_cast %371 : vector<1x2x1xf32> to vector<2x1xf32>
    %373 = arith.addf %370, %372 : vector<2x1xf32>
    %374 = vector.broadcast %339 : vector<1x1xf32> to vector<2x1xf32>
    %375 = arith.addf %373, %374 : vector<2x1xf32>
    %c2_123 = arith.constant 2 : index
    %c0_124 = arith.constant 0 : index
    %c0_125 = arith.constant 0 : index
    %376 = vector.load %arg3[%c2_123, %c0_124, %c0_125] : memref<8x2x1xf32, #tpu.memory_space<vmem>>, vector<1x2x1xf32>
    %377 = vector.shape_cast %376 : vector<1x2x1xf32> to vector<2x1xf32>
    %378 = vector.shape_cast %375 : vector<2x1xf32> to vector<1x2x1xf32>
    tpu.vector_store %arg3[%c2_123, %c0_124, %c0_125], %378 {strides = array<i32>} : memref<8x2x1xf32, #tpu.memory_space<vmem>>, vector<1x2x1xf32>,
    %379 = vector.extract_strided_slice %345 {offsets = [3, 0, 0], sizes = [1, 2, 1], strides = [1, 1, 1]} : vector<8x2x1xf32> to vector<1x2x1xf32>
    %380 = vector.shape_cast %379 : vector<1x2x1xf32> to vector<2x1xf32>
    %381 = vector.extract_strided_slice %348 {offsets = [4, 0, 0], sizes = [1, 2, 1], strides = [1, 1, 1]} : vector<8x2x1xf32> to vector<1x2x1xf32>
    %382 = vector.shape_cast %381 : vector<1x2x1xf32> to vector<2x1xf32>
    %383 = arith.addf %380, %382 : vector<2x1xf32>
    %384 = vector.broadcast %339 : vector<1x1xf32> to vector<2x1xf32>
    %385 = arith.addf %383, %384 : vector<2x1xf32>
    %c3_126 = arith.constant 3 : index
    %c0_127 = arith.constant 0 : index
    %c0_128 = arith.constant 0 : index
    %386 = vector.load %arg3[%c3_126, %c0_127, %c0_128] : memref<8x2x1xf32, #tpu.memory_space<vmem>>, vector<1x2x1xf32>
    %387 = vector.shape_cast %386 : vector<1x2x1xf32> to vector<2x1xf32>
    %388 = vector.shape_cast %385 : vector<2x1xf32> to vector<1x2x1xf32>
    tpu.vector_store %arg3[%c3_126, %c0_127, %c0_128], %388 {strides = array<i32>} : memref<8x2x1xf32, #tpu.memory_space<vmem>>, vector<1x2x1xf32>,
    %389 = vector.extract_strided_slice %345 {offsets = [4, 0, 0], sizes = [1, 2, 1], strides = [1, 1, 1]} : vector<8x2x1xf32> to vector<1x2x1xf32>
    %390 = vector.shape_cast %389 : vector<1x2x1xf32> to vector<2x1xf32>
    %391 = vector.extract_strided_slice %348 {offsets = [3, 0, 0], sizes = [1, 2, 1], strides = [1, 1, 1]} : vector<8x2x1xf32> to vector<1x2x1xf32>
    %392 = vector.shape_cast %391 : vector<1x2x1xf32> to vector<2x1xf32>
    %393 = arith.addf %390, %392 : vector<2x1xf32>
    %394 = vector.broadcast %339 : vector<1x1xf32> to vector<2x1xf32>
    %395 = arith.addf %393, %394 : vector<2x1xf32>
    %c4_129 = arith.constant 4 : index
    %c0_130 = arith.constant 0 : index
    %c0_131 = arith.constant 0 : index
    %396 = vector.load %arg3[%c4_129, %c0_130, %c0_131] : memref<8x2x1xf32, #tpu.memory_space<vmem>>, vector<1x2x1xf32>
    %397 = vector.shape_cast %396 : vector<1x2x1xf32> to vector<2x1xf32>
    %398 = vector.shape_cast %395 : vector<2x1xf32> to vector<1x2x1xf32>
    tpu.vector_store %arg3[%c4_129, %c0_130, %c0_131], %398 {strides = array<i32>} : memref<8x2x1xf32, #tpu.memory_space<vmem>>, vector<1x2x1xf32>,
    %399 = vector.extract_strided_slice %345 {offsets = [5, 0, 0], sizes = [1, 2, 1], strides = [1, 1, 1]} : vector<8x2x1xf32> to vector<1x2x1xf32>
    %400 = vector.shape_cast %399 : vector<1x2x1xf32> to vector<2x1xf32>
    %401 = vector.extract_strided_slice %348 {offsets = [2, 0, 0], sizes = [1, 2, 1], strides = [1, 1, 1]} : vector<8x2x1xf32> to vector<1x2x1xf32>
    %402 = vector.shape_cast %401 : vector<1x2x1xf32> to vector<2x1xf32>
    %403 = arith.addf %400, %402 : vector<2x1xf32>
    %404 = vector.broadcast %339 : vector<1x1xf32> to vector<2x1xf32>
    %405 = arith.addf %403, %404 : vector<2x1xf32>
    %c5_132 = arith.constant 5 : index
    %c0_133 = arith.constant 0 : index
    %c0_134 = arith.constant 0 : index
    %406 = vector.load %arg3[%c5_132, %c0_133, %c0_134] : memref<8x2x1xf32, #tpu.memory_space<vmem>>, vector<1x2x1xf32>
    %407 = vector.shape_cast %406 : vector<1x2x1xf32> to vector<2x1xf32>
    %408 = vector.shape_cast %405 : vector<2x1xf32> to vector<1x2x1xf32>
    tpu.vector_store %arg3[%c5_132, %c0_133, %c0_134], %408 {strides = array<i32>} : memref<8x2x1xf32, #tpu.memory_space<vmem>>, vector<1x2x1xf32>,
    %409 = vector.extract_strided_slice %345 {offsets = [6, 0, 0], sizes = [1, 2, 1], strides = [1, 1, 1]} : vector<8x2x1xf32> to vector<1x2x1xf32>
    %410 = vector.shape_cast %409 : vector<1x2x1xf32> to vector<2x1xf32>
    %411 = vector.extract_strided_slice %348 {offsets = [1, 0, 0], sizes = [1, 2, 1], strides = [1, 1, 1]} : vector<8x2x1xf32> to vector<1x2x1xf32>
    %412 = vector.shape_cast %411 : vector<1x2x1xf32> to vector<2x1xf32>
    %413 = arith.addf %410, %412 : vector<2x1xf32>
    %414 = vector.broadcast %339 : vector<1x1xf32> to vector<2x1xf32>
    %415 = arith.addf %413, %414 : vector<2x1xf32>
    %c6_135 = arith.constant 6 : index
    %c0_136 = arith.constant 0 : index
    %c0_137 = arith.constant 0 : index
    %416 = vector.load %arg3[%c6_135, %c0_136, %c0_137] : memref<8x2x1xf32, #tpu.memory_space<vmem>>, vector<1x2x1xf32>
    %417 = vector.shape_cast %416 : vector<1x2x1xf32> to vector<2x1xf32>
    %418 = vector.shape_cast %415 : vector<2x1xf32> to vector<1x2x1xf32>
    tpu.vector_store %arg3[%c6_135, %c0_136, %c0_137], %418 {strides = array<i32>} : memref<8x2x1xf32, #tpu.memory_space<vmem>>, vector<1x2x1xf32>,
    %419 = vector.extract_strided_slice %345 {offsets = [7, 0, 0], sizes = [1, 2, 1], strides = [1, 1, 1]} : vector<8x2x1xf32> to vector<1x2x1xf32>
    %420 = vector.shape_cast %419 : vector<1x2x1xf32> to vector<2x1xf32>
    %421 = vector.extract_strided_slice %348 {offsets = [0, 0, 0], sizes = [1, 2, 1], strides = [1, 1, 1]} : vector<8x2x1xf32> to vector<1x2x1xf32>
    %422 = vector.shape_cast %421 : vector<1x2x1xf32> to vector<2x1xf32>
    %423 = arith.addf %420, %422 : vector<2x1xf32>
    %424 = vector.broadcast %339 : vector<1x1xf32> to vector<2x1xf32>
    %425 = arith.addf %423, %424 : vector<2x1xf32>
    %c7_138 = arith.constant 7 : index
    %c0_139 = arith.constant 0 : index
    %c0_140 = arith.constant 0 : index
    %426 = vector.load %arg3[%c7_138, %c0_139, %c0_140] : memref<8x2x1xf32, #tpu.memory_space<vmem>>, vector<1x2x1xf32>
    %427 = vector.shape_cast %426 : vector<1x2x1xf32> to vector<2x1xf32>
    %428 = vector.shape_cast %425 : vector<2x1xf32> to vector<1x2x1xf32>
    tpu.vector_store %arg3[%c7_138, %c0_139, %c0_140], %428 {strides = array<i32>} : memref<8x2x1xf32, #tpu.memory_space<vmem>>, vector<1x2x1xf32>,
    return
  }
}

</mosaic_0001>

<llo_original>
// kernel: tpu_custom_call.1
$region0: #{tpu_custom_call.1}
  #allocation0 [shape = 'u32[]', space=smem, size = 0x4, offset = 0x4, fixed_abs, tag = 'smem constant byte address 0x4 - core index']
  #allocation1 [shape = 'u32[144,128]{1,0:T(1,128)}', space=vmem, size = 0x12000, scoped, tag = 'internal scratch']
  #allocation2 [shape = 'f32[8,2,128]{2,1,0:T(2,128)}', space=vmem, size = 0x2000, scoped, tag = 'scratch operand']
  #allocation3 [shape = 'f32[8,2,32]{2,1,0:T(2,128)}', space=vmem, size = 0x2000, scoped, tag = 'scratch operand']
  %s0 = inlined_call_operand.vmem [shape: f32[16,4], index: 0, kind: input, shape index: {}]
  %s1 = inlined_call_operand.vmem [shape: f32[63,8], index: 1, kind: input, shape index: {}]
  %s2 = inlined_call_operand.vmem [shape: f32[42,128], index: 2, kind: input, shape index: {}]
  %s3 = inlined_call_operand.vmem [shape: f32[8,2,1], index: 3, kind: output, shape index: {}]
  %s4 = sld [smem:[#allocation0]]
  $region22: #{tpu_custom_call.1} parent=0
    _
  %s6 = ssub.s32 1, %s4
  %s7 = scalar_select 0, %s6, %s4
  // Predicated region
  $region2: #{tpu_custom_call.1} parent=0 // pred_check
    _
  $region3: #{tpu_custom_call.1} parent=0 // pred_check_branch
    %9 = sbr.rel (0) target = $region5
  $region4: #{tpu_custom_call.1} parent=0 // pred_region
    _
  $region5: #{tpu_custom_call.1} parent=0 // pred_fallthru
    _
  // Predicated region
  $region6: #{tpu_custom_call.1} parent=0 // pred_check
    _
  $region7: #{tpu_custom_call.1} parent=0 // pred_check_branch
    %11 = sbr.rel (0) target = $region9
  $region8: #{tpu_custom_call.1} parent=0 // pred_region
    _
  $region9: #{tpu_custom_call.1} parent=0 // pred_fallthru
    _
  // Predicated region
  $region10: #{tpu_custom_call.1} parent=0 // pred_check
    _
  $region11: #{tpu_custom_call.1} parent=0 // pred_check_branch
    %13 = sbr.rel (0) target = $region13
  $region12: #{tpu_custom_call.1} parent=0 // pred_region
    _
  $region13: #{tpu_custom_call.1} parent=0 // pred_fallthru
    _
  %v14 = vld [vmem:[%s0] sm:$0xff]
  %v15 = vld [vmem:[%s0 + $0x8] sm:$0xff]
  %v16 = vlaneseq
  %v17 = vshrl.u32 %v16, 7
  %v18 = vadd.s32 %v17, 8
  %vm19 = vcmp.lt.s32.totalorder %v17, 0
  %v20 = vsub.s32 0, %v17
  %v21 = vsel %vm19, %v20, %v17
  %v22 = vshrl.u32 %v21, 1
  %v23 = vand.u32 %v21, 1
  %v24 = vsub.s32 0, %v23
  %v25 = vsel %vm19, %v24, %v23
  %vm26 = vcmp.lt.s32.totalorder %v18, 0
  %v27 = vsub.s32 0, %v18
  %v28 = vsel %vm26, %v27, %v18
  %v29 = vshrl.u32 %v28, 1
  %v30 = vand.u32 %v28, 1
  %v31 = vsub.s32 0, %v30
  %v32 = vsel %vm26, %v31, %v30
  %vm33 = vcmp.ne.s32.totalorder %v25, 0
  %vm34 = vcmp.ne.s32.totalorder %v32, 0
  %vm35 = vcmp.lt.s32.totalorder %v25, 0
  %vm36 = vcmp.lt.s32.totalorder %v32, 0
  %vm37 = vmand %vm35, %vm33
  %vm38 = vmand %vm36, %vm34
  %v39 = vadd.s32 %v25, 2
  %v40 = vadd.s32 %v32, 2
  %v41 = vsel %vm37, %v39, %v25
  %v42 = vsel %vm38, %v40, %v32
  %vm43 = vcmp.eq.s32.totalorder %v41, 0
  %vm44 = vcmp.eq.s32.totalorder %v42, 0
  %vm45 = vcmp.eq.s32.totalorder %v41, 1
  %vm46 = vcmp.eq.s32.totalorder %v42, 1
  %v47 = vld [vmem:[%s1] sm:$0xff]
  %v48 = vld [vmem:[%s1 + $0x8] sm:$0xf]
  %v49 = vld [vmem:[%s1 + $0x3c] sm:$0x1]
  %v50 = vrot.slane %v14, 7
  %v51 = vrot.slane %v15, 7
  %vm52 = vcmp.lt.s32.totalorder %v17, 1
  %v53 = vsel %vm52, %v50, %v51
  %v54 = vsel %vm52, %v51, %v50
  %v55 = vrot.slane %v14, 1
  %v56 = vrot.slane %v15, 1
  %vm57 = vcmp.lt.s32.totalorder %v17, 7
  %v58 = vsel %vm57, %v55, %v56
  %v59 = vsel %vm57, %v56, %v55
  %v60 = vsel %vm43, 1, 0
  %v61 = vsel %vm44, 1, 0
  %vm62 = vcmp.eq.s32.totalorder %v60, 1
  %vm63 = vcmp.eq.s32.totalorder %v61, 1
  %v64 = vsel %vm62, 0.0, %v54
  %v65 = vsel %vm63, 0.0, %v53
  %v66 = vsel %vm45, 1, 0
  %v67 = vsel %vm46, 1, 0
  %vm68 = vcmp.eq.s32.totalorder %v66, 1
  %vm69 = vcmp.eq.s32.totalorder %v67, 1
  %v70 = vsel %vm68, 0.0, %v58
  %v71 = vsel %vm69, 0.0, %v59
  %74 = vrot.lane.b32.xlu0 %v14, 4
  %v75 = vpop.permute.xlu0 %74
  %76 = vrot.lane.b32.xlu0 %v15, 4
  %v77 = vpop.permute.xlu0 %76
  %82 = vrot.lane.b32.xlu0 %v70, 8
  %v83 = vpop.permute.xlu0 %82
  %84 = vrot.lane.b32.xlu0 %v71, 8
  %v85 = vpop.permute.xlu0 %84
  %vm88 = vcmask 31744
  %v89 = vsel %vm88, %v64, %v75
  %v90 = vsel %vm88, %v65, %v77
  %vm91 = vcmask 64512
  %v92 = vsel %vm91, %v89, %v83
  %v93 = vsel %vm91, %v90, %v85
  %v94 = vlaneseq
  %v95 = vshrl.u32 %v94, 7
  %v96 = vsub.s32 0, %v95
  %v97 = vrot.slane %v49, %v96
  %vm98 = vcmask 97280
  %v100 = vsel %vm98, %v92, 0
  %v103 = vsel %vm98, %v93, 0
  %vm105 = vcmask 1043456
  %v107 = vsel %vm105, %v48, 0
  %109 = vmatprep.subr.mxu0 0.0
  %110 = vmatpush1.msra.mxu0 %v47
  %111 = vmatprep.subr.mxu0 0.0
  %112 = vmatpush1.msra.mxu0 %v107
  %113 = vmatprep.subr.mxu0 0.0
  %114 = vmatpush1.msra.mxu0 0.0
  %115 = vmatprep.subr.mxu0 0.0
  %116 = vmatpush1.msra.mxu0 0.0
  %117 = vmatprep.subr.mxu0 0.0
  %118 = vmatpush1.msra.mxu0 0.0
  %119 = vmatprep.subr.mxu0 0.0
  %120 = vmatpush1.msra.mxu0 0.0
  %121 = vmatprep.subr.mxu0 0.0
  %122 = vmatpush1.msra.mxu0 0.0
  %123 = vmatprep.subr.mxu0 0.0
  %124 = vmatpush1.msra.mxu0 0.0
  %125 = vmatprep.subr.mxu0 0.0
  %126 = vmatpush1.msra.mxu0 0.0
  %127 = vmatprep.subr.mxu0 0.0
  %128 = vmatpush1.msra.mxu0 0.0
  %129 = vmatprep.subr.mxu0 0.0
  %130 = vmatpush1.msra.mxu0 0.0
  %131 = vmatprep.subr.mxu0 0.0
  %132 = vmatpush1.msra.mxu0 0.0
  %133 = vmatprep.subr.mxu0 0.0
  %134 = vmatpush1.msra.mxu0 0.0
  %135 = vmatprep.subr.mxu0 0.0
  %136 = vmatpush1.msra.mxu0 0.0
  %137 = vmatprep.subr.mxu0 0.0
  %138 = vmatpush1.msra.mxu0 0.0
  %139 = vmatprep.subr.mxu0 0.0
  %140 = vmatpush1.msra.mxu0 0.0
  %141 = vmatprep.subr.mxu0 0.0
  %142 = vmatpush1.msra.mxu0 0.0
  %143 = vmatprep.subr.mxu0 0.0
  %144 = vmatpush1.msra.mxu0 0.0
  %145 = vmatprep.subr.mxu0 0.0
  %146 = vmatpush1.msra.mxu0 0.0
  %147 = vmatprep.subr.mxu0 0.0
  %148 = vmatpush1.msra.mxu0 0.0
  %149 = vmatprep.subr.mxu0 0.0
  %150 = vmatpush1.msra.mxu0 0.0
  %151 = vmatprep.subr.mxu0 0.0
  %152 = vmatpush1.msra.mxu0 0.0
  %153 = vmatprep.subr.mxu0 0.0
  %154 = vmatpush1.msra.mxu0 0.0
  %155 = vmatprep.subr.mxu0 0.0
  %156 = vmatpush1.msra.mxu0 0.0
  %157 = vmatprep.subr.mxu0 0.0
  %158 = vmatpush1.msra.mxu0 0.0
  %159 = vmatprep.subr.mxu0 0.0
  %160 = vmatpush1.msra.mxu0 0.0
  %161 = vmatprep.subr.mxu0 0.0
  %162 = vmatpush1.msra.mxu0 0.0
  %163 = vmatprep.subr.mxu0 0.0
  %164 = vmatpush1.msra.mxu0 0.0
  %165 = vmatprep.subr.mxu0 0.0
  %166 = vmatpush1.msra.mxu0 0.0
  %167 = vmatprep.subr.mxu0 0.0
  %168 = vmatpush1.msra.mxu0 0.0
  %169 = vmatprep.subr.mxu0 0.0
  %170 = vmatpush1.msra.mxu0 0.0
  %171 = vmatprep.subr.mxu0 0.0
  %172 = vmatpush1.msra.mxu0 0.0
  %173 = vmatprep.mubr.f32.mxu0 0.0
  %174 = vmatmul.mubr.f32.gmra.mrb[0].mxu0 %v100
  %v175 = vpop.f32.mrb[0].mxu0
  %v176 = vadd.f32 %v97, %v175
  %v177 = vpop.f32.mrb[0].mxu0
  %178 = vmatprep.mubr.f32.mxu0 0.0
  %179 = vmatmul.mubr.f32.gmra.mrb[0].mxu0 %v103
  %v180 = vpop.f32.mrb[0].mxu0
  %v181 = vadd.f32 %v97, %v180
  %v182 = vpop.f32.mrb[0].mxu0
  %183 = vdwg.mxu0
  %vm184 = vcmp.gt.f32.partialorder %v176, 0.0
  %vm185 = vcmp.gt.f32.partialorder %v181, 0.0
  %v186 = vmin.f32 %v176, 0.0
  %v187 = vmin.f32 %v181, 0.0
  %v188 = vmul.f32 %v186, 1.442695
  %v189 = vpow.pop %v188
  %v190 = vmul.f32 %v187, 1.442695
  %v191 = vpow.pop %v190
  %v192 = vsub.f32 %v189, 1.0
  %v193 = vsub.f32 %v191, 1.0
  %v194 = vsel %vm184, %v176, %v192
  %v195 = vsel %vm185, %v181, %v193
  %v196 = vld [vmem:[%s1 + $0xc] sm:$0xff]
  %v197 = vld [vmem:[%s1 + $0x14] sm:$0xff]
  %v198 = vld [vmem:[%s1 + $0x1c] sm:$0xff]
  %v199 = vld [vmem:[%s1 + $0x3d] sm:$0x1]
  %v200 = vrot.slane %v194, 7
  %v201 = vrot.slane %v195, 7
  %v202 = vsel %vm52, %v200, %v201
  %v203 = vsel %vm52, %v201, %v200
  %v204 = vrot.slane %v194, 1
  %v205 = vrot.slane %v195, 1
  %v206 = vsel %vm57, %v204, %v205
  %v207 = vsel %vm57, %v205, %v204
  %v208 = vsel %vm62, 0.0, %v203
  %v209 = vsel %vm63, 0.0, %v202
  %v210 = vsel %vm68, 0.0, %v206
  %v211 = vsel %vm69, 0.0, %v207
  %214 = vrot.lane.b32.xlu0 %v194, 8
  %v215 = vpop.permute.xlu0 %214
  %216 = vrot.lane.b32.xlu0 %v195, 8
  %v217 = vpop.permute.xlu0 %216
  %222 = vrot.lane.b32.xlu0 %v210, 16
  %v223 = vpop.permute.xlu0 %222
  %224 = vrot.lane.b32.xlu0 %v211, 16
  %v225 = vpop.permute.xlu0 %224
  %v228 = vsel %vm91, %v208, %v215
  %v229 = vsel %vm91, %v209, %v217
  %vm230 = vcmask 130048
  %v231 = vsel %vm230, %v228, %v223
  %v232 = vsel %vm230, %v229, %v225
  %v233 = vlaneseq
  %v234 = vshrl.u32 %v233, 7
  %v235 = vsub.s32 0, %v234
  %v236 = vrot.slane %v199, %v235
  %vm237 = vcmask 195584
  %v239 = vsel %vm237, %v231, 0
  %v242 = vsel %vm237, %v232, 0
  %244 = vmatprep.subr.mxu0 0.0
  %245 = vmatpush1.msra.mxu0 %v196
  %246 = vmatprep.subr.mxu0 0.0
  %247 = vmatpush1.msra.mxu0 %v197
  %248 = vmatprep.subr.mxu0 0.0
  %249 = vmatpush1.msra.mxu0 %v198
  %250 = vmatprep.subr.mxu0 0.0
  %251 = vmatpush1.msra.mxu0 0.0
  %252 = vmatprep.subr.mxu0 0.0
  %253 = vmatpush1.msra.mxu0 0.0
  %254 = vmatprep.subr.mxu0 0.0
  %255 = vmatpush1.msra.mxu0 0.0
  %256 = vmatprep.subr.mxu0 0.0
  %257 = vmatpush1.msra.mxu0 0.0
  %258 = vmatprep.subr.mxu0 0.0
  %259 = vmatpush1.msra.mxu0 0.0
  %260 = vmatprep.subr.mxu0 0.0
  %261 = vmatpush1.msra.mxu0 0.0
  %262 = vmatprep.subr.mxu0 0.0
  %263 = vmatpush1.msra.mxu0 0.0
  %264 = vmatprep.subr.mxu0 0.0
  %265 = vmatpush1.msra.mxu0 0.0
  %266 = vmatprep.subr.mxu0 0.0
  %267 = vmatpush1.msra.mxu0 0.0
  %268 = vmatprep.subr.mxu0 0.0
  %269 = vmatpush1.msra.mxu0 0.0
  %270 = vmatprep.subr.mxu0 0.0
  %271 = vmatpush1.msra.mxu0 0.0
  %272 = vmatprep.subr.mxu0 0.0
  %273 = vmatpush1.msra.mxu0 0.0
  %274 = vmatprep.subr.mxu0 0.0
  %275 = vmatpush1.msra.mxu0 0.0
  %276 = vmatprep.subr.mxu0 0.0
  %277 = vmatpush1.msra.mxu0 0.0
  %278 = vmatprep.subr.mxu0 0.0
  %279 = vmatpush1.msra.mxu0 0.0
  %280 = vmatprep.subr.mxu0 0.0
  %281 = vmatpush1.msra.mxu0 0.0
  %282 = vmatprep.subr.mxu0 0.0
  %283 = vmatpush1.msra.mxu0 0.0
  %284 = vmatprep.subr.mxu0 0.0
  %285 = vmatpush1.msra.mxu0 0.0
  %286 = vmatprep.subr.mxu0 0.0
  %287 = vmatpush1.msra.mxu0 0.0
  %288 = vmatprep.subr.mxu0 0.0
  %289 = vmatpush1.msra.mxu0 0.0
  %290 = vmatprep.subr.mxu0 0.0
  %291 = vmatpush1.msra.mxu0 0.0
  %292 = vmatprep.subr.mxu0 0.0
  %293 = vmatpush1.msra.mxu0 0.0
  %294 = vmatprep.subr.mxu0 0.0
  %295 = vmatpush1.msra.mxu0 0.0
  %296 = vmatprep.subr.mxu0 0.0
  %297 = vmatpush1.msra.mxu0 0.0
  %298 = vmatprep.subr.mxu0 0.0
  %299 = vmatpush1.msra.mxu0 0.0
  %300 = vmatprep.subr.mxu0 0.0
  %301 = vmatpush1.msra.mxu0 0.0
  %302 = vmatprep.subr.mxu0 0.0
  %303 = vmatpush1.msra.mxu0 0.0
  %304 = vmatprep.subr.mxu0 0.0
  %305 = vmatpush1.msra.mxu0 0.0
  %306 = vmatprep.subr.mxu0 0.0
  %307 = vmatpush1.msra.mxu0 0.0
  %308 = vmatprep.mubr.f32.mxu0 0.0
  %309 = vmatmul.mubr.f32.gmra.mrb[0].mxu0 %v239
  %v310 = vpop.f32.mrb[0].mxu0
  %v311 = vadd.f32 %v236, %v310
  %v312 = vpop.f32.mrb[0].mxu0
  %313 = vmatprep.mubr.f32.mxu0 0.0
  %314 = vmatmul.mubr.f32.gmra.mrb[0].mxu0 %v242
  %v315 = vpop.f32.mrb[0].mxu0
  %v316 = vadd.f32 %v236, %v315
  %v317 = vpop.f32.mrb[0].mxu0
  %318 = vdwg.mxu0
  %vm319 = vcmp.gt.f32.partialorder %v311, 0.0
  %vm320 = vcmp.gt.f32.partialorder %v316, 0.0
  %v321 = vmin.f32 %v311, 0.0
  %v322 = vmin.f32 %v316, 0.0
  %v323 = vmul.f32 %v321, 1.442695
  %v324 = vpow.pop %v323
  %v325 = vmul.f32 %v322, 1.442695
  %v326 = vpow.pop %v325
  %v327 = vsub.f32 %v324, 1.0
  %v328 = vsub.f32 %v326, 1.0
  %v329 = vsel %vm319, %v311, %v327
  %v330 = vsel %vm320, %v316, %v328
  %v331 = vld [vmem:[%s1 + $0x24] sm:$0xff]
  %v332 = vld [vmem:[%s1 + $0x2c] sm:$0xff]
  %v333 = vld [vmem:[%s1 + $0x34] sm:$0xff]
  %v334 = vld [vmem:[%s1 + $0x3e] sm:$0x1]
  %v335 = vrot.slane %v329, 7
  %v336 = vrot.slane %v330, 7
  %v337 = vsel %vm52, %v335, %v336
  %v338 = vsel %vm52, %v336, %v335
  %v339 = vrot.slane %v329, 1
  %v340 = vrot.slane %v330, 1
  %v341 = vsel %vm57, %v339, %v340
  %v342 = vsel %vm57, %v340, %v339
  %v343 = vsel %vm62, 0.0, %v338
  %v344 = vsel %vm63, 0.0, %v337
  %v345 = vsel %vm68, 0.0, %v341
  %v346 = vsel %vm69, 0.0, %v342
  %349 = vrot.lane.b32.xlu0 %v329, 8
  %v350 = vpop.permute.xlu0 %349
  %351 = vrot.lane.b32.xlu0 %v330, 8
  %v352 = vpop.permute.xlu0 %351
  %357 = vrot.lane.b32.xlu0 %v345, 16
  %v358 = vpop.permute.xlu0 %357
  %359 = vrot.lane.b32.xlu0 %v346, 16
  %v360 = vpop.permute.xlu0 %359
  %v363 = vsel %vm91, %v343, %v350
  %v364 = vsel %vm91, %v344, %v352
  %v365 = vsel %vm230, %v363, %v358
  %v366 = vsel %vm230, %v364, %v360
  %v367 = vlaneseq
  %v368 = vshrl.u32 %v367, 7
  %v369 = vsub.s32 0, %v368
  %v370 = vrot.slane %v334, %v369
  %v372 = vsel %vm237, %v365, 0
  %v375 = vsel %vm237, %v366, 0
  %377 = vmatprep.subr.mxu0 0.0
  %378 = vmatpush1.msra.mxu0 %v331
  %379 = vmatprep.subr.mxu0 0.0
  %380 = vmatpush1.msra.mxu0 %v332
  %381 = vmatprep.subr.mxu0 0.0
  %382 = vmatpush1.msra.mxu0 %v333
  %383 = vmatprep.subr.mxu0 0.0
  %384 = vmatpush1.msra.mxu0 0.0
  %385 = vmatprep.subr.mxu0 0.0
  %386 = vmatpush1.msra.mxu0 0.0
  %387 = vmatprep.subr.mxu0 0.0
  %388 = vmatpush1.msra.mxu0 0.0
  %389 = vmatprep.subr.mxu0 0.0
  %390 = vmatpush1.msra.mxu0 0.0
  %391 = vmatprep.subr.mxu0 0.0
  %392 = vmatpush1.msra.mxu0 0.0
  %393 = vmatprep.subr.mxu0 0.0
  %394 = vmatpush1.msra.mxu0 0.0
  %395 = vmatprep.subr.mxu0 0.0
  %396 = vmatpush1.msra.mxu0 0.0
  %397 = vmatprep.subr.mxu0 0.0
  %398 = vmatpush1.msra.mxu0 0.0
  %399 = vmatprep.subr.mxu0 0.0
  %400 = vmatpush1.msra.mxu0 0.0
  %401 = vmatprep.subr.mxu0 0.0
  %402 = vmatpush1.msra.mxu0 0.0
  %403 = vmatprep.subr.mxu0 0.0
  %404 = vmatpush1.msra.mxu0 0.0
  %405 = vmatprep.subr.mxu0 0.0
  %406 = vmatpush1.msra.mxu0 0.0
  %407 = vmatprep.subr.mxu0 0.0
  %408 = vmatpush1.msra.mxu0 0.0
  %409 = vmatprep.subr.mxu0 0.0
  %410 = vmatpush1.msra.mxu0 0.0
  %411 = vmatprep.subr.mxu0 0.0
  %412 = vmatpush1.msra.mxu0 0.0
  %413 = vmatprep.subr.mxu0 0.0
  %414 = vmatpush1.msra.mxu0 0.0
  %415 = vmatprep.subr.mxu0 0.0
  %416 = vmatpush1.msra.mxu0 0.0
  %417 = vmatprep.subr.mxu0 0.0
  %418 = vmatpush1.msra.mxu0 0.0
  %419 = vmatprep.subr.mxu0 0.0
  %420 = vmatpush1.msra.mxu0 0.0
  %421 = vmatprep.subr.mxu0 0.0
  %422 = vmatpush1.msra.mxu0 0.0
  %423 = vmatprep.subr.mxu0 0.0
  %424 = vmatpush1.msra.mxu0 0.0
  %425 = vmatprep.subr.mxu0 0.0
  %426 = vmatpush1.msra.mxu0 0.0
  %427 = vmatprep.subr.mxu0 0.0
  %428 = vmatpush1.msra.mxu0 0.0
  %429 = vmatprep.subr.mxu0 0.0
  %430 = vmatpush1.msra.mxu0 0.0
  %431 = vmatprep.subr.mxu0 0.0
  %432 = vmatpush1.msra.mxu0 0.0
  %433 = vmatprep.subr.mxu0 0.0
  %434 = vmatpush1.msra.mxu0 0.0
  %435 = vmatprep.subr.mxu0 0.0
  %436 = vmatpush1.msra.mxu0 0.0
  %437 = vmatprep.subr.mxu0 0.0
  %438 = vmatpush1.msra.mxu0 0.0
  %439 = vmatprep.subr.mxu0 0.0
  %440 = vmatpush1.msra.mxu0 0.0
  %441 = vmatprep.mubr.f32.mxu0 0.0
  %442 = vmatmul.mubr.f32.gmra.mrb[0].mxu0 %v372
  %v443 = vpop.f32.mrb[0].mxu0
  %v444 = vadd.f32 %v370, %v443
  %v445 = vpop.f32.mrb[0].mxu0
  %446 = vmatprep.mubr.f32.mxu0 0.0
  %447 = vmatmul.mubr.f32.gmra.mrb[0].mxu0 %v375
  %v448 = vpop.f32.mrb[0].mxu0
  %v449 = vadd.f32 %v370, %v448
  %v450 = vpop.f32.mrb[0].mxu0
  %451 = vdwg.mxu0
  %v452 = vadd.f32 %v444, %v14
  %v453 = vadd.f32 %v449, %v15
  %v454 = vmul.f32 %v452, %v14
  %v455 = vmul.f32 %v453, %v15
  %v456 = vld [vmem:[%s2 + $0x20] sm:$0xf]
  %v457 = vld [vmem:[%s2 + $0x28] sm:$0x1]
  %v458 = vlaneseq
  %v459 = vshrl.u32 %v458, 7
  %v460 = vsub.s32 0, %v459
  %v461 = vrot.slane %v457, %v460
  %v463 = vsel %vm88, %v454, 0
  %v466 = vsel %vm88, %v455, 0
  %v469 = vsel %vm105, %v456, 0
  %471 = vmatprep.subr.mxu0 0.0
  %472 = vmatpush1.msra.mxu0 %v469
  %473 = vmatprep.subr.mxu0 0.0
  %474 = vmatpush1.msra.mxu0 0.0
  %475 = vmatprep.subr.mxu0 0.0
  %476 = vmatpush1.msra.mxu0 0.0
  %477 = vmatprep.subr.mxu0 0.0
  %478 = vmatpush1.msra.mxu0 0.0
  %479 = vmatprep.subr.mxu0 0.0
  %480 = vmatpush1.msra.mxu0 0.0
  %481 = vmatprep.subr.mxu0 0.0
  %482 = vmatpush1.msra.mxu0 0.0
  %483 = vmatprep.subr.mxu0 0.0
  %484 = vmatpush1.msra.mxu0 0.0
  %485 = vmatprep.subr.mxu0 0.0
  %486 = vmatpush1.msra.mxu0 0.0
  %487 = vmatprep.subr.mxu0 0.0
  %488 = vmatpush1.msra.mxu0 0.0
  %489 = vmatprep.subr.mxu0 0.0
  %490 = vmatpush1.msra.mxu0 0.0
  %491 = vmatprep.subr.mxu0 0.0
  %492 = vmatpush1.msra.mxu0 0.0
  %493 = vmatprep.subr.mxu0 0.0
  %494 = vmatpush1.msra.mxu0 0.0
  %495 = vmatprep.subr.mxu0 0.0
  %496 = vmatpush1.msra.mxu0 0.0
  %497 = vmatprep.subr.mxu0 0.0
  %498 = vmatpush1.msra.mxu0 0.0
  %499 = vmatprep.subr.mxu0 0.0
  %500 = vmatpush1.msra.mxu0 0.0
  %501 = vmatprep.subr.mxu0 0.0
  %502 = vmatpush1.msra.mxu0 0.0
  %503 = vmatprep.subr.mxu0 0.0
  %504 = vmatpush1.msra.mxu0 0.0
  %505 = vmatprep.subr.mxu0 0.0
  %506 = vmatpush1.msra.mxu0 0.0
  %507 = vmatprep.subr.mxu0 0.0
  %508 = vmatpush1.msra.mxu0 0.0
  %509 = vmatprep.subr.mxu0 0.0
  %510 = vmatpush1.msra.mxu0 0.0
  %511 = vmatprep.subr.mxu0 0.0
  %512 = vmatpush1.msra.mxu0 0.0
  %513 = vmatprep.subr.mxu0 0.0
  %514 = vmatpush1.msra.mxu0 0.0
  %515 = vmatprep.subr.mxu0 0.0
  %516 = vmatpush1.msra.mxu0 0.0
  %517 = vmatprep.subr.mxu0 0.0
  %518 = vmatpush1.msra.mxu0 0.0
  %519 = vmatprep.subr.mxu0 0.0
  %520 = vmatpush1.msra.mxu0 0.0
  %521 = vmatprep.subr.mxu0 0.0
  %522 = vmatpush1.msra.mxu0 0.0
  %523 = vmatprep.subr.mxu0 0.0
  %524 = vmatpush1.msra.mxu0 0.0
  %525 = vmatprep.subr.mxu0 0.0
  %526 = vmatpush1.msra.mxu0 0.0
  %527 = vmatprep.subr.mxu0 0.0
  %528 = vmatpush1.msra.mxu0 0.0
  %529 = vmatprep.subr.mxu0 0.0
  %530 = vmatpush1.msra.mxu0 0.0
  %531 = vmatprep.subr.mxu0 0.0
  %532 = vmatpush1.msra.mxu0 0.0
  %533 = vmatprep.subr.mxu0 0.0
  %534 = vmatpush1.msra.mxu0 0.0
  %535 = vmatprep.mubr.f32.mxu0 0.0
  %536 = vmatmul.mubr.f32.gmra.mrb[0].mxu0 %v463
  %v537 = vpop.f32.mrb[0].mxu0
  %v538 = vadd.f32 %v461, %v537
  %v539 = vpop.f32.mrb[0].mxu0
  %540 = vmatprep.mubr.f32.mxu0 0.0
  %541 = vmatmul.mubr.f32.gmra.mrb[0].mxu0 %v466
  %v542 = vpop.f32.mrb[0].mxu0
  %v543 = vadd.f32 %v461, %v542
  %v544 = vpop.f32.mrb[0].mxu0
  %545 = vdwg.mxu0
  %v546 = vld [vmem:[%s2 + $0x24] sm:$0xf]
  %v548 = vsel %vm105, %v546, 0
  %550 = vmatprep.subr.mxu0 0.0
  %551 = vmatpush1.msra.mxu0 %v548
  %552 = vmatprep.subr.mxu0 0.0
  %553 = vmatpush1.msra.mxu0 0.0
  %554 = vmatprep.subr.mxu0 0.0
  %555 = vmatpush1.msra.mxu0 0.0
  %556 = vmatprep.subr.mxu0 0.0
  %557 = vmatpush1.msra.mxu0 0.0
  %558 = vmatprep.subr.mxu0 0.0
  %559 = vmatpush1.msra.mxu0 0.0
  %560 = vmatprep.subr.mxu0 0.0
  %561 = vmatpush1.msra.mxu0 0.0
  %562 = vmatprep.subr.mxu0 0.0
  %563 = vmatpush1.msra.mxu0 0.0
  %564 = vmatprep.subr.mxu0 0.0
  %565 = vmatpush1.msra.mxu0 0.0
  %566 = vmatprep.subr.mxu0 0.0
  %567 = vmatpush1.msra.mxu0 0.0
  %568 = vmatprep.subr.mxu0 0.0
  %569 = vmatpush1.msra.mxu0 0.0
  %570 = vmatprep.subr.mxu0 0.0
  %571 = vmatpush1.msra.mxu0 0.0
  %572 = vmatprep.subr.mxu0 0.0
  %573 = vmatpush1.msra.mxu0 0.0
  %574 = vmatprep.subr.mxu0 0.0
  %575 = vmatpush1.msra.mxu0 0.0
  %576 = vmatprep.subr.mxu0 0.0
  %577 = vmatpush1.msra.mxu0 0.0
  %578 = vmatprep.subr.mxu0 0.0
  %579 = vmatpush1.msra.mxu0 0.0
  %580 = vmatprep.subr.mxu0 0.0
  %581 = vmatpush1.msra.mxu0 0.0
  %582 = vmatprep.subr.mxu0 0.0
  %583 = vmatpush1.msra.mxu0 0.0
  %584 = vmatprep.subr.mxu0 0.0
  %585 = vmatpush1.msra.mxu0 0.0
  %586 = vmatprep.subr.mxu0 0.0
  %587 = vmatpush1.msra.mxu0 0.0
  %588 = vmatprep.subr.mxu0 0.0
  %589 = vmatpush1.msra.mxu0 0.0
  %590 = vmatprep.subr.mxu0 0.0
  %591 = vmatpush1.msra.mxu0 0.0
  %592 = vmatprep.subr.mxu0 0.0
  %593 = vmatpush1.msra.mxu0 0.0
  %594 = vmatprep.subr.mxu0 0.0
  %595 = vmatpush1.msra.mxu0 0.0
  %596 = vmatprep.subr.mxu0 0.0
  %597 = vmatpush1.msra.mxu0 0.0
  %598 = vmatprep.subr.mxu0 0.0
  %599 = vmatpush1.msra.mxu0 0.0
  %600 = vmatprep.subr.mxu0 0.0
  %601 = vmatpush1.msra.mxu0 0.0
  %602 = vmatprep.subr.mxu0 0.0
  %603 = vmatpush1.msra.mxu0 0.0
  %604 = vmatprep.subr.mxu0 0.0
  %605 = vmatpush1.msra.mxu0 0.0
  %606 = vmatprep.subr.mxu0 0.0
  %607 = vmatpush1.msra.mxu0 0.0
  %608 = vmatprep.subr.mxu0 0.0
  %609 = vmatpush1.msra.mxu0 0.0
  %610 = vmatprep.subr.mxu0 0.0
  %611 = vmatpush1.msra.mxu0 0.0
  %612 = vmatprep.subr.mxu0 0.0
  %613 = vmatpush1.msra.mxu0 0.0
  %614 = vmatprep.mubr.f32.mxu0 0.0
  %615 = vmatmul.mubr.f32.gmra.mrb[0].mxu0 %v463
  %v616 = vpop.f32.mrb[0].mxu0
  %v617 = vadd.f32 0.0, %v616
  %v618 = vpop.f32.mrb[0].mxu0
  %619 = vmatprep.mubr.f32.mxu0 0.0
  %620 = vmatmul.mubr.f32.gmra.mrb[0].mxu0 %v466
  %v621 = vpop.f32.mrb[0].mxu0
  %v622 = vadd.f32 0.0, %v621
  %v623 = vpop.f32.mrb[0].mxu0
  %624 = vdwg.mxu0
  %v626 = vrot.slane %v622, 6
  %v628 = vadd.f32 %v538, %v626
  %629 = vst [vmem:[#allocation2] sm:$0x3] %v628
  %v630 = vrot.slane %v622, 2
  %v632 = vadd.f32 %v538, %v630
  %s633 = scalar_lea.vmem [#allocation2], 2
  %634 = vst [vmem:[%s633 - $0x2] sm:$0xc] %v632
  %s635 = scalar_lea.vmem [#allocation2], 4
  %636 = vst [vmem:[%s635 - $0x4] sm:$0x30] %v628
  %s637 = scalar_lea.vmem [#allocation2], 6
  %638 = vst [vmem:[%s637 - $0x6] sm:$0xc0] %v632
  %v640 = vrot.slane %v617, 6
  %v642 = vadd.f32 %v543, %v640
  %s643 = scalar_lea.vmem [#allocation2], 8
  %644 = vst [vmem:[%s643] sm:$0x3] %v642
  %v645 = vrot.slane %v617, 2
  %v647 = vadd.f32 %v543, %v645
  %s648 = scalar_lea.vmem [#allocation2], 10
  %649 = vst [vmem:[%s648 - $0x2] sm:$0xc] %v647
  %s650 = scalar_lea.vmem [#allocation2], 12
  %651 = vst [vmem:[%s650 - $0x4] sm:$0x30] %v642
  %s652 = scalar_lea.vmem [#allocation2], 14
  %653 = vst [vmem:[%s652 - $0x6] sm:$0xc0] %v647
  %v654 = vld [vmem:[%s2] sm:$0xff]
  %v655 = vld [vmem:[%s2 + $0x8] sm:$0xff]
  %v656 = vld [vmem:[%s2 + $0x10] sm:$0xff]
  %v657 = vld [vmem:[%s2 + $0x18] sm:$0xff]
  %v658 = vld [vmem:[#allocation2] sm:$0x3]
  %vm659 = vcmask 261120
  %v661 = vsel %vm659, 0.0, 0
  %663 = vmatprep.subr.mxu0 0.0
  %664 = vmatpush1.msra.mxu0 %v654
  %665 = vmatprep.subr.mxu0 0.0
  %666 = vmatpush1.msra.mxu0 %v655
  %667 = vmatprep.subr.mxu0 0.0
  %668 = vmatpush1.msra.mxu0 %v656
  %669 = vmatprep.subr.mxu0 0.0
  %670 = vmatpush1.msra.mxu0 %v657
  %671 = vmatprep.subr.mxu0 0.0
  %672 = vmatpush1.msra.mxu0 0.0
  %673 = vmatprep.subr.mxu0 0.0
  %674 = vmatpush1.msra.mxu0 0.0
  %675 = vmatprep.subr.mxu0 0.0
  %676 = vmatpush1.msra.mxu0 0.0
  %677 = vmatprep.subr.mxu0 0.0
  %678 = vmatpush1.msra.mxu0 0.0
  %679 = vmatprep.subr.mxu0 0.0
  %680 = vmatpush1.msra.mxu0 0.0
  %681 = vmatprep.subr.mxu0 0.0
  %682 = vmatpush1.msra.mxu0 0.0
  %683 = vmatprep.subr.mxu0 0.0
  %684 = vmatpush1.msra.mxu0 0.0
  %685 = vmatprep.subr.mxu0 0.0
  %686 = vmatpush1.msra.mxu0 0.0
  %687 = vmatprep.subr.mxu0 0.0
  %688 = vmatpush1.msra.mxu0 0.0
  %689 = vmatprep.subr.mxu0 0.0
  %690 = vmatpush1.msra.mxu0 0.0
  %691 = vmatprep.subr.mxu0 0.0
  %692 = vmatpush1.msra.mxu0 0.0
  %693 = vmatprep.subr.mxu0 0.0
  %694 = vmatpush1.msra.mxu0 0.0
  %695 = vmatprep.subr.mxu0 0.0
  %696 = vmatpush1.msra.mxu0 0.0
  %697 = vmatprep.subr.mxu0 0.0
  %698 = vmatpush1.msra.mxu0 0.0
  %699 = vmatprep.subr.mxu0 0.0
  %700 = vmatpush1.msra.mxu0 0.0
  %701 = vmatprep.subr.mxu0 0.0
  %702 = vmatpush1.msra.mxu0 0.0
  %703 = vmatprep.subr.mxu0 0.0
  %704 = vmatpush1.msra.mxu0 0.0
  %705 = vmatprep.subr.mxu0 0.0
  %706 = vmatpush1.msra.mxu0 0.0
  %707 = vmatprep.subr.mxu0 0.0
  %708 = vmatpush1.msra.mxu0 0.0
  %709 = vmatprep.subr.mxu0 0.0
  %710 = vmatpush1.msra.mxu0 0.0
  %711 = vmatprep.subr.mxu0 0.0
  %712 = vmatpush1.msra.mxu0 0.0
  %713 = vmatprep.subr.mxu0 0.0
  %714 = vmatpush1.msra.mxu0 0.0
  %715 = vmatprep.subr.mxu0 0.0
  %716 = vmatpush1.msra.mxu0 0.0
  %717 = vmatprep.subr.mxu0 0.0
  %718 = vmatpush1.msra.mxu0 0.0
  %719 = vmatprep.subr.mxu0 0.0
  %720 = vmatpush1.msra.mxu0 0.0
  %721 = vmatprep.subr.mxu0 0.0
  %722 = vmatpush1.msra.mxu0 0.0
  %723 = vmatprep.subr.mxu0 0.0
  %724 = vmatpush1.msra.mxu0 0.0
  %725 = vmatprep.subr.mxu0 0.0
  %726 = vmatpush1.msra.mxu0 0.0
  %727 = vmatprep.mubr.f32.mxu0 0.0
  %728 = vmatmul.mubr.f32.gmra.mrb[0].mxu0 %v661
  %v729 = vpop.f32.mrb[0].mxu0
  %v730 = vadd.f32 %v658, %v729
  %v731 = vpop.f32.mrb[0].mxu0
  %732 = vdwg.mxu0
  %v733 = vxor.u32 %v730, 2147483648
  %v734 = vmul.f32 %v733, 1.442695
  %v735 = vpow.pop %v734
  %v736 = vadd.f32 %v735, 1.0
  %v737 = vrcp.pop %v736
  %v738 = vmul.f32 1.0, %v737
  %v739 = vtanh.pop %v730
  %v740 = vmul.f32 %v738, 0.0
  %742 = vrot.lane.b32.xlu0 %v739, 64
  %v743 = vpop.permute.xlu0 %742
  %v745 = vmul.f32 %v738, %v743
  %747 = vrot.lane.b32.xlu0 %v745, 32
  %v748 = vpop.permute.xlu0 %747
  %v750 = vadd.f32 %v740, %v748
  %v751 = vtanh.pop %v750
  %753 = vrot.lane.b32.xlu0 %v751, 64
  %v754 = vpop.permute.xlu0 %753
  %v756 = vmul.f32 %v738, %v754
  %758 = vrot.lane.b32.xlu0 %v756, 32
  %v759 = vpop.permute.xlu0 %758
  %vm761 = vcmask 254976
  %762 = vst.msk [vmem:[#allocation3] sm:$0x3] %vm761, %v759
  %v763 = vld [vmem:[%s633] sm:$0x3]
  %v764 = vsel %vm659, %v759, 0
  %766 = vmatprep.subr.mxu0 0.0
  %767 = vmatpush1.msra.mxu0 %v654
  %768 = vmatprep.subr.mxu0 0.0
  %769 = vmatpush1.msra.mxu0 %v655
  %770 = vmatprep.subr.mxu0 0.0
  %771 = vmatpush1.msra.mxu0 %v656
  %772 = vmatprep.subr.mxu0 0.0
  %773 = vmatpush1.msra.mxu0 %v657
  %774 = vmatprep.subr.mxu0 0.0
  %775 = vmatpush1.msra.mxu0 0.0
  %776 = vmatprep.subr.mxu0 0.0
  %777 = vmatpush1.msra.mxu0 0.0
  %778 = vmatprep.subr.mxu0 0.0
  %779 = vmatpush1.msra.mxu0 0.0
  %780 = vmatprep.subr.mxu0 0.0
  %781 = vmatpush1.msra.mxu0 0.0
  %782 = vmatprep.subr.mxu0 0.0
  %783 = vmatpush1.msra.mxu0 0.0
  %784 = vmatprep.subr.mxu0 0.0
  %785 = vmatpush1.msra.mxu0 0.0
  %786 = vmatprep.subr.mxu0 0.0
  %787 = vmatpush1.msra.mxu0 0.0
  %788 = vmatprep.subr.mxu0 0.0
  %789 = vmatpush1.msra.mxu0 0.0
  %790 = vmatprep.subr.mxu0 0.0
  %791 = vmatpush1.msra.mxu0 0.0
  %792 = vmatprep.subr.mxu0 0.0
  %793 = vmatpush1.msra.mxu0 0.0
  %794 = vmatprep.subr.mxu0 0.0
  %795 = vmatpush1.msra.mxu0 0.0
  %796 = vmatprep.subr.mxu0 0.0
  %797 = vmatpush1.msra.mxu0 0.0
  %798 = vmatprep.subr.mxu0 0.0
  %799 = vmatpush1.msra.mxu0 0.0
  %800 = vmatprep.subr.mxu0 0.0
  %801 = vmatpush1.msra.mxu0 0.0
  %802 = vmatprep.subr.mxu0 0.0
  %803 = vmatpush1.msra.mxu0 0.0
  %804 = vmatprep.subr.mxu0 0.0
  %805 = vmatpush1.msra.mxu0 0.0
  %806 = vmatprep.subr.mxu0 0.0
  %807 = vmatpush1.msra.mxu0 0.0
  %808 = vmatprep.subr.mxu0 0.0
  %809 = vmatpush1.msra.mxu0 0.0
  %810 = vmatprep.subr.mxu0 0.0
  %811 = vmatpush1.msra.mxu0 0.0
  %812 = vmatprep.subr.mxu0 0.0
  %813 = vmatpush1.msra.mxu0 0.0
  %814 = vmatprep.subr.mxu0 0.0
  %815 = vmatpush1.msra.mxu0 0.0
  %816 = vmatprep.subr.mxu0 0.0
  %817 = vmatpush1.msra.mxu0 0.0
  %818 = vmatprep.subr.mxu0 0.0
  %819 = vmatpush1.msra.mxu0 0.0
  %820 = vmatprep.subr.mxu0 0.0
  %821 = vmatpush1.msra.mxu0 0.0
  %822 = vmatprep.subr.mxu0 0.0
  %823 = vmatpush1.msra.mxu0 0.0
  %824 = vmatprep.subr.mxu0 0.0
  %825 = vmatpush1.msra.mxu0 0.0
  %826 = vmatprep.subr.mxu0 0.0
  %827 = vmatpush1.msra.mxu0 0.0
  %828 = vmatprep.subr.mxu0 0.0
  %829 = vmatpush1.msra.mxu0 0.0
  %830 = vmatprep.mubr.f32.mxu0 0.0
  %831 = vmatmul.mubr.f32.gmra.mrb[0].mxu0 %v764
  %v832 = vpop.f32.mrb[0].mxu0
  %v833 = vadd.f32 %v763, %v832
  %v834 = vpop.f32.mrb[0].mxu0
  %835 = vdwg.mxu0
  %v836 = vxor.u32 %v833, 2147483648
  %v837 = vmul.f32 %v836, 1.442695
  %v838 = vpow.pop %v837
  %v839 = vadd.f32 %v838, 1.0
  %v840 = vrcp.pop %v839
  %v841 = vmul.f32 1.0, %v840
  %v842 = vtanh.pop %v833
  %v843 = vmul.f32 %v841, %v750
  %845 = vrot.lane.b32.xlu0 %v842, 64
  %v846 = vpop.permute.xlu0 %845
  %v848 = vmul.f32 %v841, %v846
  %850 = vrot.lane.b32.xlu0 %v848, 32
  %v851 = vpop.permute.xlu0 %850
  %v853 = vadd.f32 %v843, %v851
  %v854 = vtanh.pop %v853
  %856 = vrot.lane.b32.xlu0 %v854, 64
  %v857 = vpop.permute.xlu0 %856
  %v859 = vmul.f32 %v841, %v857
  %861 = vrot.lane.b32.xlu0 %v859, 32
  %v862 = vpop.permute.xlu0 %861
  %s864 = scalar_lea.vmem [#allocation3], 2
  %865 = vst.msk [vmem:[%s864] sm:$0x3] %vm761, %v862
  %v866 = vld [vmem:[%s635] sm:$0x3]
  %v867 = vsel %vm659, %v862, 0
  %869 = vmatprep.subr.mxu0 0.0
  %870 = vmatpush1.msra.mxu0 %v654
  %871 = vmatprep.subr.mxu0 0.0
  %872 = vmatpush1.msra.mxu0 %v655
  %873 = vmatprep.subr.mxu0 0.0
  %874 = vmatpush1.msra.mxu0 %v656
  %875 = vmatprep.subr.mxu0 0.0
  %876 = vmatpush1.msra.mxu0 %v657
  %877 = vmatprep.subr.mxu0 0.0
  %878 = vmatpush1.msra.mxu0 0.0
  %879 = vmatprep.subr.mxu0 0.0
  %880 = vmatpush1.msra.mxu0 0.0
  %881 = vmatprep.subr.mxu0 0.0
  %882 = vmatpush1.msra.mxu0 0.0
  %883 = vmatprep.subr.mxu0 0.0
  %884 = vmatpush1.msra.mxu0 0.0
  %885 = vmatprep.subr.mxu0 0.0
  %886 = vmatpush1.msra.mxu0 0.0
  %887 = vmatprep.subr.mxu0 0.0
  %888 = vmatpush1.msra.mxu0 0.0
  %889 = vmatprep.subr.mxu0 0.0
  %890 = vmatpush1.msra.mxu0 0.0
  %891 = vmatprep.subr.mxu0 0.0
  %892 = vmatpush1.msra.mxu0 0.0
  %893 = vmatprep.subr.mxu0 0.0
  %894 = vmatpush1.msra.mxu0 0.0
  %895 = vmatprep.subr.mxu0 0.0
  %896 = vmatpush1.msra.mxu0 0.0
  %897 = vmatprep.subr.mxu0 0.0
  %898 = vmatpush1.msra.mxu0 0.0
  %899 = vmatprep.subr.mxu0 0.0
  %900 = vmatpush1.msra.mxu0 0.0
  %901 = vmatprep.subr.mxu0 0.0
  %902 = vmatpush1.msra.mxu0 0.0
  %903 = vmatprep.subr.mxu0 0.0
  %904 = vmatpush1.msra.mxu0 0.0
  %905 = vmatprep.subr.mxu0 0.0
  %906 = vmatpush1.msra.mxu0 0.0
  %907 = vmatprep.subr.mxu0 0.0
  %908 = vmatpush1.msra.mxu0 0.0
  %909 = vmatprep.subr.mxu0 0.0
  %910 = vmatpush1.msra.mxu0 0.0
  %911 = vmatprep.subr.mxu0 0.0
  %912 = vmatpush1.msra.mxu0 0.0
  %913 = vmatprep.subr.mxu0 0.0
  %914 = vmatpush1.msra.mxu0 0.0
  %915 = vmatprep.subr.mxu0 0.0
  %916 = vmatpush1.msra.mxu0 0.0
  %917 = vmatprep.subr.mxu0 0.0
  %918 = vmatpush1.msra.mxu0 0.0
  %919 = vmatprep.subr.mxu0 0.0
  %920 = vmatpush1.msra.mxu0 0.0
  %921 = vmatprep.subr.mxu0 0.0
  %922 = vmatpush1.msra.mxu0 0.0
  %923 = vmatprep.subr.mxu0 0.0
  %924 = vmatpush1.msra.mxu0 0.0
  %925 = vmatprep.subr.mxu0 0.0
  %926 = vmatpush1.msra.mxu0 0.0
  %927 = vmatprep.subr.mxu0 0.0
  %928 = vmatpush1.msra.mxu0 0.0
  %929 = vmatprep.subr.mxu0 0.0
  %930 = vmatpush1.msra.mxu0 0.0
  %931 = vmatprep.subr.mxu0 0.0
  %932 = vmatpush1.msra.mxu0 0.0
  %933 = vmatprep.mubr.f32.mxu0 0.0
  %934 = vmatmul.mubr.f32.gmra.mrb[0].mxu0 %v867
  %v935 = vpop.f32.mrb[0].mxu0
  %v936 = vadd.f32 %v866, %v935
  %v937 = vpop.f32.mrb[0].mxu0
  %938 = vdwg.mxu0
  %v939 = vxor.u32 %v936, 2147483648
  %v940 = vmul.f32 %v939, 1.442695
  %v941 = vpow.pop %v940
  %v942 = vadd.f32 %v941, 1.0
  %v943 = vrcp.pop %v942
  %v944 = vmul.f32 1.0, %v943
  %v945 = vtanh.pop %v936
  %v946 = vmul.f32 %v944, %v853
  %948 = vrot.lane.b32.xlu0 %v945, 64
  %v949 = vpop.permute.xlu0 %948
  %v951 = vmul.f32 %v944, %v949
  %953 = vrot.lane.b32.xlu0 %v951, 32
  %v954 = vpop.permute.xlu0 %953
  %v956 = vadd.f32 %v946, %v954
  %v957 = vtanh.pop %v956
  %959 = vrot.lane.b32.xlu0 %v957, 64
  %v960 = vpop.permute.xlu0 %959
  %v962 = vmul.f32 %v944, %v960
  %964 = vrot.lane.b32.xlu0 %v962, 32
  %v965 = vpop.permute.xlu0 %964
  %s967 = scalar_lea.vmem [#allocation3], 4
  %968 = vst.msk [vmem:[%s967] sm:$0x3] %vm761, %v965
  %v969 = vld [vmem:[%s637] sm:$0x3]
  %v970 = vsel %vm659, %v965, 0
  %972 = vmatprep.subr.mxu0 0.0
  %973 = vmatpush1.msra.mxu0 %v654
  %974 = vmatprep.subr.mxu0 0.0
  %975 = vmatpush1.msra.mxu0 %v655
  %976 = vmatprep.subr.mxu0 0.0
  %977 = vmatpush1.msra.mxu0 %v656
  %978 = vmatprep.subr.mxu0 0.0
  %979 = vmatpush1.msra.mxu0 %v657
  %980 = vmatprep.subr.mxu0 0.0
  %981 = vmatpush1.msra.mxu0 0.0
  %982 = vmatprep.subr.mxu0 0.0
  %983 = vmatpush1.msra.mxu0 0.0
  %984 = vmatprep.subr.mxu0 0.0
  %985 = vmatpush1.msra.mxu0 0.0
  %986 = vmatprep.subr.mxu0 0.0
  %987 = vmatpush1.msra.mxu0 0.0
  %988 = vmatprep.subr.mxu0 0.0
  %989 = vmatpush1.msra.mxu0 0.0
  %990 = vmatprep.subr.mxu0 0.0
  %991 = vmatpush1.msra.mxu0 0.0
  %992 = vmatprep.subr.mxu0 0.0
  %993 = vmatpush1.msra.mxu0 0.0
  %994 = vmatprep.subr.mxu0 0.0
  %995 = vmatpush1.msra.mxu0 0.0
  %996 = vmatprep.subr.mxu0 0.0
  %997 = vmatpush1.msra.mxu0 0.0
  %998 = vmatprep.subr.mxu0 0.0
  %999 = vmatpush1.msra.mxu0 0.0
  %1000 = vmatprep.subr.mxu0 0.0
  %1001 = vmatpush1.msra.mxu0 0.0
  %1002 = vmatprep.subr.mxu0 0.0
  %1003 = vmatpush1.msra.mxu0 0.0
  %1004 = vmatprep.subr.mxu0 0.0
  %1005 = vmatpush1.msra.mxu0 0.0
  %1006 = vmatprep.subr.mxu0 0.0
  %1007 = vmatpush1.msra.mxu0 0.0
  %1008 = vmatprep.subr.mxu0 0.0
  %1009 = vmatpush1.msra.mxu0 0.0
  %1010 = vmatprep.subr.mxu0 0.0
  %1011 = vmatpush1.msra.mxu0 0.0
  %1012 = vmatprep.subr.mxu0 0.0
  %1013 = vmatpush1.msra.mxu0 0.0
  %1014 = vmatprep.subr.mxu0 0.0
  %1015 = vmatpush1.msra.mxu0 0.0
  %1016 = vmatprep.subr.mxu0 0.0
  %1017 = vmatpush1.msra.mxu0 0.0
  %1018 = vmatprep.subr.mxu0 0.0
  %1019 = vmatpush1.msra.mxu0 0.0
  %1020 = vmatprep.subr.mxu0 0.0
  %1021 = vmatpush1.msra.mxu0 0.0
  %1022 = vmatprep.subr.mxu0 0.0
  %1023 = vmatpush1.msra.mxu0 0.0
  %1024 = vmatprep.subr.mxu0 0.0
  %1025 = vmatpush1.msra.mxu0 0.0
  %1026 = vmatprep.subr.mxu0 0.0
  %1027 = vmatpush1.msra.mxu0 0.0
  %1028 = vmatprep.subr.mxu0 0.0
  %1029 = vmatpush1.msra.mxu0 0.0
  %1030 = vmatprep.subr.mxu0 0.0
  %1031 = vmatpush1.msra.mxu0 0.0
  %1032 = vmatprep.subr.mxu0 0.0
  %1033 = vmatpush1.msra.mxu0 0.0
  %1034 = vmatprep.subr.mxu0 0.0
  %1035 = vmatpush1.msra.mxu0 0.0
  %1036 = vmatprep.mubr.f32.mxu0 0.0
  %1037 = vmatmul.mubr.f32.gmra.mrb[0].mxu0 %v970
  %v1038 = vpop.f32.mrb[0].mxu0
  %v1039 = vadd.f32 %v969, %v1038
  %v1040 = vpop.f32.mrb[0].mxu0
  %1041 = vdwg.mxu0
  %v1042 = vxor.u32 %v1039, 2147483648
  %v1043 = vmul.f32 %v1042, 1.442695
  %v1044 = vpow.pop %v1043
  %v1045 = vadd.f32 %v1044, 1.0
  %v1046 = vrcp.pop %v1045
  %v1047 = vmul.f32 1.0, %v1046
  %v1048 = vtanh.pop %v1039
  %v1049 = vmul.f32 %v1047, %v956
  %1051 = vrot.lane.b32.xlu0 %v1048, 64
  %v1052 = vpop.permute.xlu0 %1051
  %v1054 = vmul.f32 %v1047, %v1052
  %1056 = vrot.lane.b32.xlu0 %v1054, 32
  %v1057 = vpop.permute.xlu0 %1056
  %v1059 = vadd.f32 %v1049, %v1057
  %v1060 = vtanh.pop %v1059
  %1062 = vrot.lane.b32.xlu0 %v1060, 64
  %v1063 = vpop.permute.xlu0 %1062
  %v1065 = vmul.f32 %v1047, %v1063
  %1067 = vrot.lane.b32.xlu0 %v1065, 32
  %v1068 = vpop.permute.xlu0 %1067
  %s1070 = scalar_lea.vmem [#allocation3], 6
  %1071 = vst.msk [vmem:[%s1070] sm:$0x3] %vm761, %v1068
  %v1072 = vld [vmem:[%s643] sm:$0x3]
  %v1073 = vsel %vm659, %v1068, 0
  %1075 = vmatprep.subr.mxu0 0.0
  %1076 = vmatpush1.msra.mxu0 %v654
  %1077 = vmatprep.subr.mxu0 0.0
  %1078 = vmatpush1.msra.mxu0 %v655
  %1079 = vmatprep.subr.mxu0 0.0
  %1080 = vmatpush1.msra.mxu0 %v656
  %1081 = vmatprep.subr.mxu0 0.0
  %1082 = vmatpush1.msra.mxu0 %v657
  %1083 = vmatprep.subr.mxu0 0.0
  %1084 = vmatpush1.msra.mxu0 0.0
  %1085 = vmatprep.subr.mxu0 0.0
  %1086 = vmatpush1.msra.mxu0 0.0
  %1087 = vmatprep.subr.mxu0 0.0
  %1088 = vmatpush1.msra.mxu0 0.0
  %1089 = vmatprep.subr.mxu0 0.0
  %1090 = vmatpush1.msra.mxu0 0.0
  %1091 = vmatprep.subr.mxu0 0.0
  %1092 = vmatpush1.msra.mxu0 0.0
  %1093 = vmatprep.subr.mxu0 0.0
  %1094 = vmatpush1.msra.mxu0 0.0
  %1095 = vmatprep.subr.mxu0 0.0
  %1096 = vmatpush1.msra.mxu0 0.0
  %1097 = vmatprep.subr.mxu0 0.0
  %1098 = vmatpush1.msra.mxu0 0.0
  %1099 = vmatprep.subr.mxu0 0.0
  %1100 = vmatpush1.msra.mxu0 0.0
  %1101 = vmatprep.subr.mxu0 0.0
  %1102 = vmatpush1.msra.mxu0 0.0
  %1103 = vmatprep.subr.mxu0 0.0
  %1104 = vmatpush1.msra.mxu0 0.0
  %1105 = vmatprep.subr.mxu0 0.0
  %1106 = vmatpush1.msra.mxu0 0.0
  %1107 = vmatprep.subr.mxu0 0.0
  %1108 = vmatpush1.msra.mxu0 0.0
  %1109 = vmatprep.subr.mxu0 0.0
  %1110 = vmatpush1.msra.mxu0 0.0
  %1111 = vmatprep.subr.mxu0 0.0
  %1112 = vmatpush1.msra.mxu0 0.0
  %1113 = vmatprep.subr.mxu0 0.0
  %1114 = vmatpush1.msra.mxu0 0.0
  %1115 = vmatprep.subr.mxu0 0.0
  %1116 = vmatpush1.msra.mxu0 0.0
  %1117 = vmatprep.subr.mxu0 0.0
  %1118 = vmatpush1.msra.mxu0 0.0
  %1119 = vmatprep.subr.mxu0 0.0
  %1120 = vmatpush1.msra.mxu0 0.0
  %1121 = vmatprep.subr.mxu0 0.0
  %1122 = vmatpush1.msra.mxu0 0.0
  %1123 = vmatprep.subr.mxu0 0.0
  %1124 = vmatpush1.msra.mxu0 0.0
  %1125 = vmatprep.subr.mxu0 0.0
  %1126 = vmatpush1.msra.mxu0 0.0
  %1127 = vmatprep.subr.mxu0 0.0
  %1128 = vmatpush1.msra.mxu0 0.0
  %1129 = vmatprep.subr.mxu0 0.0
  %1130 = vmatpush1.msra.mxu0 0.0
  %1131 = vmatprep.subr.mxu0 0.0
  %1132 = vmatpush1.msra.mxu0 0.0
  %1133 = vmatprep.subr.mxu0 0.0
  %1134 = vmatpush1.msra.mxu0 0.0
  %1135 = vmatprep.subr.mxu0 0.0
  %1136 = vmatpush1.msra.mxu0 0.0
  %1137 = vmatprep.subr.mxu0 0.0
  %1138 = vmatpush1.msra.mxu0 0.0
  %1139 = vmatprep.mubr.f32.mxu0 0.0
  %1140 = vmatmul.mubr.f32.gmra.mrb[0].mxu0 %v1073
  %v1141 = vpop.f32.mrb[0].mxu0
  %v1142 = vadd.f32 %v1072, %v1141
  %v1143 = vpop.f32.mrb[0].mxu0
  %1144 = vdwg.mxu0
  %v1145 = vxor.u32 %v1142, 2147483648
  %v1146 = vmul.f32 %v1145, 1.442695
  %v1147 = vpow.pop %v1146
  %v1148 = vadd.f32 %v1147, 1.0
  %v1149 = vrcp.pop %v1148
  %v1150 = vmul.f32 1.0, %v1149
  %v1151 = vtanh.pop %v1142
  %v1152 = vmul.f32 %v1150, %v1059
  %1154 = vrot.lane.b32.xlu0 %v1151, 64
  %v1155 = vpop.permute.xlu0 %1154
  %v1157 = vmul.f32 %v1150, %v1155
  %1159 = vrot.lane.b32.xlu0 %v1157, 32
  %v1160 = vpop.permute.xlu0 %1159
  %v1162 = vadd.f32 %v1152, %v1160
  %v1163 = vtanh.pop %v1162
  %1165 = vrot.lane.b32.xlu0 %v1163, 64
  %v1166 = vpop.permute.xlu0 %1165
  %v1168 = vmul.f32 %v1150, %v1166
  %1170 = vrot.lane.b32.xlu0 %v1168, 32
  %v1171 = vpop.permute.xlu0 %1170
  %s1173 = scalar_lea.vmem [#allocation3], 8
  %1174 = vst.msk [vmem:[%s1173] sm:$0x3] %vm761, %v1171
  %v1175 = vld [vmem:[%s648] sm:$0x3]
  %v1176 = vsel %vm659, %v1171, 0
  %1178 = vmatprep.subr.mxu0 0.0
  %1179 = vmatpush1.msra.mxu0 %v654
  %1180 = vmatprep.subr.mxu0 0.0
  %1181 = vmatpush1.msra.mxu0 %v655
  %1182 = vmatprep.subr.mxu0 0.0
  %1183 = vmatpush1.msra.mxu0 %v656
  %1184 = vmatprep.subr.mxu0 0.0
  %1185 = vmatpush1.msra.mxu0 %v657
  %1186 = vmatprep.subr.mxu0 0.0
  %1187 = vmatpush1.msra.mxu0 0.0
  %1188 = vmatprep.subr.mxu0 0.0
  %1189 = vmatpush1.msra.mxu0 0.0
  %1190 = vmatprep.subr.mxu0 0.0
  %1191 = vmatpush1.msra.mxu0 0.0
  %1192 = vmatprep.subr.mxu0 0.0
  %1193 = vmatpush1.msra.mxu0 0.0
  %1194 = vmatprep.subr.mxu0 0.0
  %1195 = vmatpush1.msra.mxu0 0.0
  %1196 = vmatprep.subr.mxu0 0.0
  %1197 = vmatpush1.msra.mxu0 0.0
  %1198 = vmatprep.subr.mxu0 0.0
  %1199 = vmatpush1.msra.mxu0 0.0
  %1200 = vmatprep.subr.mxu0 0.0
  %1201 = vmatpush1.msra.mxu0 0.0
  %1202 = vmatprep.subr.mxu0 0.0
  %1203 = vmatpush1.msra.mxu0 0.0
  %1204 = vmatprep.subr.mxu0 0.0
  %1205 = vmatpush1.msra.mxu0 0.0
  %1206 = vmatprep.subr.mxu0 0.0
  %1207 = vmatpush1.msra.mxu0 0.0
  %1208 = vmatprep.subr.mxu0 0.0
  %1209 = vmatpush1.msra.mxu0 0.0
  %1210 = vmatprep.subr.mxu0 0.0
  %1211 = vmatpush1.msra.mxu0 0.0
  %1212 = vmatprep.subr.mxu0 0.0
  %1213 = vmatpush1.msra.mxu0 0.0
  %1214 = vmatprep.subr.mxu0 0.0
  %1215 = vmatpush1.msra.mxu0 0.0
  %1216 = vmatprep.subr.mxu0 0.0
  %1217 = vmatpush1.msra.mxu0 0.0
  %1218 = vmatprep.subr.mxu0 0.0
  %1219 = vmatpush1.msra.mxu0 0.0
  %1220 = vmatprep.subr.mxu0 0.0
  %1221 = vmatpush1.msra.mxu0 0.0
  %1222 = vmatprep.subr.mxu0 0.0
  %1223 = vmatpush1.msra.mxu0 0.0
  %1224 = vmatprep.subr.mxu0 0.0
  %1225 = vmatpush1.msra.mxu0 0.0
  %1226 = vmatprep.subr.mxu0 0.0
  %1227 = vmatpush1.msra.mxu0 0.0
  %1228 = vmatprep.subr.mxu0 0.0
  %1229 = vmatpush1.msra.mxu0 0.0
  %1230 = vmatprep.subr.mxu0 0.0
  %1231 = vmatpush1.msra.mxu0 0.0
  %1232 = vmatprep.subr.mxu0 0.0
  %1233 = vmatpush1.msra.mxu0 0.0
  %1234 = vmatprep.subr.mxu0 0.0
  %1235 = vmatpush1.msra.mxu0 0.0
  %1236 = vmatprep.subr.mxu0 0.0
  %1237 = vmatpush1.msra.mxu0 0.0
  %1238 = vmatprep.subr.mxu0 0.0
  %1239 = vmatpush1.msra.mxu0 0.0
  %1240 = vmatprep.subr.mxu0 0.0
  %1241 = vmatpush1.msra.mxu0 0.0
  %1242 = vmatprep.mubr.f32.mxu0 0.0
  %1243 = vmatmul.mubr.f32.gmra.mrb[0].mxu0 %v1176
  %v1244 = vpop.f32.mrb[0].mxu0
  %v1245 = vadd.f32 %v1175, %v1244
  %v1246 = vpop.f32.mrb[0].mxu0
  %1247 = vdwg.mxu0
  %v1248 = vxor.u32 %v1245, 2147483648
  %v1249 = vmul.f32 %v1248, 1.442695
  %v1250 = vpow.pop %v1249
  %v1251 = vadd.f32 %v1250, 1.0
  %v1252 = vrcp.pop %v1251
  %v1253 = vmul.f32 1.0, %v1252
  %v1254 = vtanh.pop %v1245
  %v1255 = vmul.f32 %v1253, %v1162
  %1257 = vrot.lane.b32.xlu0 %v1254, 64
  %v1258 = vpop.permute.xlu0 %1257
  %v1260 = vmul.f32 %v1253, %v1258
  %1262 = vrot.lane.b32.xlu0 %v1260, 32
  %v1263 = vpop.permute.xlu0 %1262
  %v1265 = vadd.f32 %v1255, %v1263
  %v1266 = vtanh.pop %v1265
  %1268 = vrot.lane.b32.xlu0 %v1266, 64
  %v1269 = vpop.permute.xlu0 %1268
  %v1271 = vmul.f32 %v1253, %v1269
  %1273 = vrot.lane.b32.xlu0 %v1271, 32
  %v1274 = vpop.permute.xlu0 %1273
  %s1276 = scalar_lea.vmem [#allocation3], 10
  %1277 = vst.msk [vmem:[%s1276] sm:$0x3] %vm761, %v1274
  %v1278 = vld [vmem:[%s650] sm:$0x3]
  %v1279 = vsel %vm659, %v1274, 0
  %1281 = vmatprep.subr.mxu0 0.0
  %1282 = vmatpush1.msra.mxu0 %v654
  %1283 = vmatprep.subr.mxu0 0.0
  %1284 = vmatpush1.msra.mxu0 %v655
  %1285 = vmatprep.subr.mxu0 0.0
  %1286 = vmatpush1.msra.mxu0 %v656
  %1287 = vmatprep.subr.mxu0 0.0
  %1288 = vmatpush1.msra.mxu0 %v657
  %1289 = vmatprep.subr.mxu0 0.0
  %1290 = vmatpush1.msra.mxu0 0.0
  %1291 = vmatprep.subr.mxu0 0.0
  %1292 = vmatpush1.msra.mxu0 0.0
  %1293 = vmatprep.subr.mxu0 0.0
  %1294 = vmatpush1.msra.mxu0 0.0
  %1295 = vmatprep.subr.mxu0 0.0
  %1296 = vmatpush1.msra.mxu0 0.0
  %1297 = vmatprep.subr.mxu0 0.0
  %1298 = vmatpush1.msra.mxu0 0.0
  %1299 = vmatprep.subr.mxu0 0.0
  %1300 = vmatpush1.msra.mxu0 0.0
  %1301 = vmatprep.subr.mxu0 0.0
  %1302 = vmatpush1.msra.mxu0 0.0
  %1303 = vmatprep.subr.mxu0 0.0
  %1304 = vmatpush1.msra.mxu0 0.0
  %1305 = vmatprep.subr.mxu0 0.0
  %1306 = vmatpush1.msra.mxu0 0.0
  %1307 = vmatprep.subr.mxu0 0.0
  %1308 = vmatpush1.msra.mxu0 0.0
  %1309 = vmatprep.subr.mxu0 0.0
  %1310 = vmatpush1.msra.mxu0 0.0
  %1311 = vmatprep.subr.mxu0 0.0
  %1312 = vmatpush1.msra.mxu0 0.0
  %1313 = vmatprep.subr.mxu0 0.0
  %1314 = vmatpush1.msra.mxu0 0.0
  %1315 = vmatprep.subr.mxu0 0.0
  %1316 = vmatpush1.msra.mxu0 0.0
  %1317 = vmatprep.subr.mxu0 0.0
  %1318 = vmatpush1.msra.mxu0 0.0
  %1319 = vmatprep.subr.mxu0 0.0
  %1320 = vmatpush1.msra.mxu0 0.0
  %1321 = vmatprep.subr.mxu0 0.0
  %1322 = vmatpush1.msra.mxu0 0.0
  %1323 = vmatprep.subr.mxu0 0.0
  %1324 = vmatpush1.msra.mxu0 0.0
  %1325 = vmatprep.subr.mxu0 0.0
  %1326 = vmatpush1.msra.mxu0 0.0
  %1327 = vmatprep.subr.mxu0 0.0
  %1328 = vmatpush1.msra.mxu0 0.0
  %1329 = vmatprep.subr.mxu0 0.0
  %1330 = vmatpush1.msra.mxu0 0.0
  %1331 = vmatprep.subr.mxu0 0.0
  %1332 = vmatpush1.msra.mxu0 0.0
  %1333 = vmatprep.subr.mxu0 0.0
  %1334 = vmatpush1.msra.mxu0 0.0
  %1335 = vmatprep.subr.mxu0 0.0
  %1336 = vmatpush1.msra.mxu0 0.0
  %1337 = vmatprep.subr.mxu0 0.0
  %1338 = vmatpush1.msra.mxu0 0.0
  %1339 = vmatprep.subr.mxu0 0.0
  %1340 = vmatpush1.msra.mxu0 0.0
  %1341 = vmatprep.subr.mxu0 0.0
  %1342 = vmatpush1.msra.mxu0 0.0
  %1343 = vmatprep.subr.mxu0 0.0
  %1344 = vmatpush1.msra.mxu0 0.0
  %1345 = vmatprep.mubr.f32.mxu0 0.0
  %1346 = vmatmul.mubr.f32.gmra.mrb[0].mxu0 %v1279
  %v1347 = vpop.f32.mrb[0].mxu0
  %v1348 = vadd.f32 %v1278, %v1347
  %v1349 = vpop.f32.mrb[0].mxu0
  %1350 = vdwg.mxu0
  %v1351 = vxor.u32 %v1348, 2147483648
  %v1352 = vmul.f32 %v1351, 1.442695
  %v1353 = vpow.pop %v1352
  %v1354 = vadd.f32 %v1353, 1.0
  %v1355 = vrcp.pop %v1354
  %v1356 = vmul.f32 1.0, %v1355
  %v1357 = vtanh.pop %v1348
  %v1358 = vmul.f32 %v1356, %v1265
  %1360 = vrot.lane.b32.xlu0 %v1357, 64
  %v1361 = vpop.permute.xlu0 %1360
  %v1363 = vmul.f32 %v1356, %v1361
  %1365 = vrot.lane.b32.xlu0 %v1363, 32
  %v1366 = vpop.permute.xlu0 %1365
  %v1368 = vadd.f32 %v1358, %v1366
  %v1369 = vtanh.pop %v1368
  %1371 = vrot.lane.b32.xlu0 %v1369, 64
  %v1372 = vpop.permute.xlu0 %1371
  %v1374 = vmul.f32 %v1356, %v1372
  %1376 = vrot.lane.b32.xlu0 %v1374, 32
  %v1377 = vpop.permute.xlu0 %1376
  %s1379 = scalar_lea.vmem [#allocation3], 12
  %1380 = vst.msk [vmem:[%s1379] sm:$0x3] %vm761, %v1377
  %v1381 = vld [vmem:[%s652] sm:$0x3]
  %v1382 = vsel %vm659, %v1377, 0
  %1384 = vmatprep.subr.mxu0 0.0
  %1385 = vmatpush1.msra.mxu0 %v654
  %1386 = vmatprep.subr.mxu0 0.0
  %1387 = vmatpush1.msra.mxu0 %v655
  %1388 = vmatprep.subr.mxu0 0.0
  %1389 = vmatpush1.msra.mxu0 %v656
  %1390 = vmatprep.subr.mxu0 0.0
  %1391 = vmatpush1.msra.mxu0 %v657
  %1392 = vmatprep.subr.mxu0 0.0
  %1393 = vmatpush1.msra.mxu0 0.0
  %1394 = vmatprep.subr.mxu0 0.0
  %1395 = vmatpush1.msra.mxu0 0.0
  %1396 = vmatprep.subr.mxu0 0.0
  %1397 = vmatpush1.msra.mxu0 0.0
  %1398 = vmatprep.subr.mxu0 0.0
  %1399 = vmatpush1.msra.mxu0 0.0
  %1400 = vmatprep.subr.mxu0 0.0
  %1401 = vmatpush1.msra.mxu0 0.0
  %1402 = vmatprep.subr.mxu0 0.0
  %1403 = vmatpush1.msra.mxu0 0.0
  %1404 = vmatprep.subr.mxu0 0.0
  %1405 = vmatpush1.msra.mxu0 0.0
  %1406 = vmatprep.subr.mxu0 0.0
  %1407 = vmatpush1.msra.mxu0 0.0
  %1408 = vmatprep.subr.mxu0 0.0
  %1409 = vmatpush1.msra.mxu0 0.0
  %1410 = vmatprep.subr.mxu0 0.0
  %1411 = vmatpush1.msra.mxu0 0.0
  %1412 = vmatprep.subr.mxu0 0.0
  %1413 = vmatpush1.msra.mxu0 0.0
  %1414 = vmatprep.subr.mxu0 0.0
  %1415 = vmatpush1.msra.mxu0 0.0
  %1416 = vmatprep.subr.mxu0 0.0
  %1417 = vmatpush1.msra.mxu0 0.0
  %1418 = vmatprep.subr.mxu0 0.0
  %1419 = vmatpush1.msra.mxu0 0.0
  %1420 = vmatprep.subr.mxu0 0.0
  %1421 = vmatpush1.msra.mxu0 0.0
  %1422 = vmatprep.subr.mxu0 0.0
  %1423 = vmatpush1.msra.mxu0 0.0
  %1424 = vmatprep.subr.mxu0 0.0
  %1425 = vmatpush1.msra.mxu0 0.0
  %1426 = vmatprep.subr.mxu0 0.0
  %1427 = vmatpush1.msra.mxu0 0.0
  %1428 = vmatprep.subr.mxu0 0.0
  %1429 = vmatpush1.msra.mxu0 0.0
  %1430 = vmatprep.subr.mxu0 0.0
  %1431 = vmatpush1.msra.mxu0 0.0
  %1432 = vmatprep.subr.mxu0 0.0
  %1433 = vmatpush1.msra.mxu0 0.0
  %1434 = vmatprep.subr.mxu0 0.0
  %1435 = vmatpush1.msra.mxu0 0.0
  %1436 = vmatprep.subr.mxu0 0.0
  %1437 = vmatpush1.msra.mxu0 0.0
  %1438 = vmatprep.subr.mxu0 0.0
  %1439 = vmatpush1.msra.mxu0 0.0
  %1440 = vmatprep.subr.mxu0 0.0
  %1441 = vmatpush1.msra.mxu0 0.0
  %1442 = vmatprep.subr.mxu0 0.0
  %1443 = vmatpush1.msra.mxu0 0.0
  %1444 = vmatprep.subr.mxu0 0.0
  %1445 = vmatpush1.msra.mxu0 0.0
  %1446 = vmatprep.subr.mxu0 0.0
  %1447 = vmatpush1.msra.mxu0 0.0
  %1448 = vmatprep.mubr.f32.mxu0 0.0
  %1449 = vmatmul.mubr.f32.gmra.mrb[0].mxu0 %v1382
  %v1450 = vpop.f32.mrb[0].mxu0
  %v1451 = vadd.f32 %v1381, %v1450
  %v1452 = vpop.f32.mrb[0].mxu0
  %1453 = vdwg.mxu0
  %v1454 = vxor.u32 %v1451, 2147483648
  %v1455 = vmul.f32 %v1454, 1.442695
  %v1456 = vpow.pop %v1455
  %v1457 = vadd.f32 %v1456, 1.0
  %v1458 = vrcp.pop %v1457
  %v1459 = vmul.f32 1.0, %v1458
  %v1460 = vtanh.pop %v1451
  %v1461 = vmul.f32 %v1459, %v1368
  %1463 = vrot.lane.b32.xlu0 %v1460, 64
  %v1464 = vpop.permute.xlu0 %1463
  %v1466 = vmul.f32 %v1459, %v1464
  %1468 = vrot.lane.b32.xlu0 %v1466, 32
  %v1469 = vpop.permute.xlu0 %1468
  %v1471 = vadd.f32 %v1461, %v1469
  %v1472 = vtanh.pop %v1471
  %1474 = vrot.lane.b32.xlu0 %v1472, 64
  %v1475 = vpop.permute.xlu0 %1474
  %v1477 = vmul.f32 %v1459, %v1475
  %1479 = vrot.lane.b32.xlu0 %v1477, 32
  %v1480 = vpop.permute.xlu0 %1479
  %s1482 = scalar_lea.vmem [#allocation3], 14
  %1483 = vst.msk [vmem:[%s1482] sm:$0x3] %vm761, %v1480
  %v1484 = vld [vmem:[#allocation3] sm:$0x3]
  %v1485 = vld [vmem:[#allocation3 + $0x2] sm:$0x3]
  %v1486 = vld [vmem:[#allocation3 + $0x4] sm:$0x3]
  %v1487 = vld [vmem:[#allocation3 + $0x6] sm:$0x3]
  %v1488 = vld [vmem:[#allocation3 + $0x8] sm:$0x3]
  %v1489 = vld [vmem:[#allocation3 + $0xa] sm:$0x3]
  %v1490 = vld [vmem:[#allocation3 + $0xc] sm:$0x3]
  %v1491 = vld [vmem:[#allocation3 + $0xe] sm:$0x3]
  %v1492 = vld [vmem:[%s2 + $0x29] sm:$0x1]
  %v1493 = vlaneseq
  %v1494 = vshrl.u32 %v1493, 7
  %v1495 = vsub.s32 0, %v1494
  %v1496 = vrot.slane %v1492, %v1495
  %v1497 = vmul.f32 %v1484, %v1496
  %v1498 = vmul.f32 %v1485, %v1496
  %v1499 = vmul.f32 %v1486, %v1496
  %v1500 = vmul.f32 %v1487, %v1496
  %v1501 = vmul.f32 %v1488, %v1496
  %v1502 = vmul.f32 %v1489, %v1496
  %v1503 = vmul.f32 %v1490, %v1496
  %v1504 = vmul.f32 %v1491, %v1496
  %vm1505 = vcmask 123904
  %v1506 = vsel %vm1505, %v1497, 0.0
  %1507 = vadd.xlane.f32.xlu0 %v1506
  %v1508 = vpop.xlane.xlu0 %1507
  %v1509 = vsel %vm1505, %v1498, 0.0
  %1510 = vadd.xlane.f32.xlu0 %v1509
  %v1511 = vpop.xlane.xlu0 %1510
  %v1512 = vsel %vm1505, %v1499, 0.0
  %1513 = vadd.xlane.f32.xlu0 %v1512
  %v1514 = vpop.xlane.xlu0 %1513
  %v1515 = vsel %vm1505, %v1500, 0.0
  %1516 = vadd.xlane.f32.xlu0 %v1515
  %v1517 = vpop.xlane.xlu0 %1516
  %v1518 = vsel %vm1505, %v1501, 0.0
  %1519 = vadd.xlane.f32.xlu0 %v1518
  %v1520 = vpop.xlane.xlu0 %1519
  %v1521 = vsel %vm1505, %v1502, 0.0
  %1522 = vadd.xlane.f32.xlu0 %v1521
  %v1523 = vpop.xlane.xlu0 %1522
  %v1524 = vsel %vm1505, %v1503, 0.0
  %1525 = vadd.xlane.f32.xlu0 %v1524
  %v1526 = vpop.xlane.xlu0 %1525
  %v1527 = vsel %vm1505, %v1504, 0.0
  %1528 = vadd.xlane.f32.xlu0 %v1527
  %v1529 = vpop.xlane.xlu0 %1528
  %1538 = vrot.lane.b32.xlu0 %v1497, 112
  %v1539 = vpop.permute.xlu0 %1538
  %1540 = vrot.lane.b32.xlu0 %v1498, 112
  %v1541 = vpop.permute.xlu0 %1540
  %1542 = vrot.lane.b32.xlu0 %v1499, 112
  %v1543 = vpop.permute.xlu0 %1542
  %1544 = vrot.lane.b32.xlu0 %v1500, 112
  %v1545 = vpop.permute.xlu0 %1544
  %1546 = vrot.lane.b32.xlu0 %v1501, 112
  %v1547 = vpop.permute.xlu0 %1546
  %1548 = vrot.lane.b32.xlu0 %v1502, 112
  %v1549 = vpop.permute.xlu0 %1548
  %1550 = vrot.lane.b32.xlu0 %v1503, 112
  %v1551 = vpop.permute.xlu0 %1550
  %1552 = vrot.lane.b32.xlu0 %v1504, 112
  %v1553 = vpop.permute.xlu0 %1552
  %v1562 = vsel %vm1505, %v1539, 0.0
  %1563 = vadd.xlane.f32.xlu0 %v1562
  %v1564 = vpop.xlane.xlu0 %1563
  %v1565 = vsel %vm1505, %v1541, 0.0
  %1566 = vadd.xlane.f32.xlu0 %v1565
  %v1567 = vpop.xlane.xlu0 %1566
  %v1568 = vsel %vm1505, %v1543, 0.0
  %1569 = vadd.xlane.f32.xlu0 %v1568
  %v1570 = vpop.xlane.xlu0 %1569
  %v1571 = vsel %vm1505, %v1545, 0.0
  %1572 = vadd.xlane.f32.xlu0 %v1571
  %v1573 = vpop.xlane.xlu0 %1572
  %v1574 = vsel %vm1505, %v1547, 0.0
  %1575 = vadd.xlane.f32.xlu0 %v1574
  %v1576 = vpop.xlane.xlu0 %1575
  %v1577 = vsel %vm1505, %v1549, 0.0
  %1578 = vadd.xlane.f32.xlu0 %v1577
  %v1579 = vpop.xlane.xlu0 %1578
  %v1580 = vsel %vm1505, %v1551, 0.0
  %1581 = vadd.xlane.f32.xlu0 %v1580
  %v1582 = vpop.xlane.xlu0 %1581
  %v1583 = vsel %vm1505, %v1553, 0.0
  %1584 = vadd.xlane.f32.xlu0 %v1583
  %v1585 = vpop.xlane.xlu0 %1584
  %v1586 = vadd.f32 %v1508, %v1585
  %v1587 = vadd.f32 %v1586, %v1496
  %1589 = vrot.lane.b32.xlu0 %v1587, 96
  %v1590 = vpop.permute.xlu0 %1589
  %vm1592 = vcmask 1024
  %1593 = vst.msk [vmem:[%s3] sm:$0x3] %vm1592, %v1590
  %v1594 = vadd.f32 %v1511, %v1582
  %v1595 = vadd.f32 %v1594, %v1496
  %1597 = vrot.lane.b32.xlu0 %v1595, 96
  %v1598 = vpop.permute.xlu0 %1597
  %s1600 = scalar_lea.vmem %s3, 2
  %1601 = vst.msk [vmem:[%s1600] sm:$0x3] %vm1592, %v1598
  %v1602 = vadd.f32 %v1514, %v1579
  %v1603 = vadd.f32 %v1602, %v1496
  %1605 = vrot.lane.b32.xlu0 %v1603, 96
  %v1606 = vpop.permute.xlu0 %1605
  %s1608 = scalar_lea.vmem %s3, 4
  %1609 = vst.msk [vmem:[%s1608] sm:$0x3] %vm1592, %v1606
  %v1610 = vadd.f32 %v1517, %v1576
  %v1611 = vadd.f32 %v1610, %v1496
  %1613 = vrot.lane.b32.xlu0 %v1611, 96
  %v1614 = vpop.permute.xlu0 %1613
  %s1616 = scalar_lea.vmem %s3, 6
  %1617 = vst.msk [vmem:[%s1616] sm:$0x3] %vm1592, %v1614
  %v1618 = vadd.f32 %v1520, %v1573
  %v1619 = vadd.f32 %v1618, %v1496
  %1621 = vrot.lane.b32.xlu0 %v1619, 96
  %v1622 = vpop.permute.xlu0 %1621
  %s1624 = scalar_lea.vmem %s3, 8
  %1625 = vst.msk [vmem:[%s1624] sm:$0x3] %vm1592, %v1622
  %v1626 = vadd.f32 %v1523, %v1570
  %v1627 = vadd.f32 %v1626, %v1496
  %1629 = vrot.lane.b32.xlu0 %v1627, 96
  %v1630 = vpop.permute.xlu0 %1629
  %s1632 = scalar_lea.vmem %s3, 10
  %1633 = vst.msk [vmem:[%s1632] sm:$0x3] %vm1592, %v1630
  %v1634 = vadd.f32 %v1526, %v1567
  %v1635 = vadd.f32 %v1634, %v1496
  %1637 = vrot.lane.b32.xlu0 %v1635, 96
  %v1638 = vpop.permute.xlu0 %1637
  %s1640 = scalar_lea.vmem %s3, 12
  %1641 = vst.msk [vmem:[%s1640] sm:$0x3] %vm1592, %v1638
  %v1642 = vadd.f32 %v1529, %v1564
  %v1643 = vadd.f32 %v1642, %v1496
  %1645 = vrot.lane.b32.xlu0 %v1643, 96
  %v1646 = vpop.permute.xlu0 %1645
  %s1648 = scalar_lea.vmem %s3, 14
  %1649 = vst.msk [vmem:[%s1648] sm:$0x3] %vm1592, %v1646
  // Predicated region
  $region14: #{tpu_custom_call.1} parent=0 // pred_check
    _
  $region15: #{tpu_custom_call.1} parent=0 // pred_check_branch
    %1651 = sbr.rel (0) target = $region17
  $region16: #{tpu_custom_call.1} parent=0 // pred_region
    _
  $region17: #{tpu_custom_call.1} parent=0 // pred_fallthru
    _
  // Predicated region
  $region18: #{tpu_custom_call.1} parent=0 // pred_check
    _
  $region19: #{tpu_custom_call.1} parent=0 // pred_check_branch
    %1653 = sbr.rel (0) target = $region21
  $region20: #{tpu_custom_call.1} parent=0 // pred_region
    _
  $region21: #{tpu_custom_call.1} parent=0 // pred_fallthru
    _

</llo_original>
